<compile_context>
chip_gen: v5e
topology: v5e:2x2
jax: 0.10.0
libtpu: 0.0.40
codegen_flags: <defaults>
</compile_context>

<pallas_src>
import functools

import jax
import jax.numpy as jnp
import numpy as np
from jax import lax
from jax.experimental import pallas as pl
from jax.experimental.pallas import tpu as pltpu

# ---------------- problem configuration (small, deterministic) ----------------
N = 2048             # number of samples
F = 16               # number of features
DEPTH = 3            # tree depth
NUM_TREES = 8        # trees in this boosting stage (multiple of 8 -> full sublane)
J = 2 ** DEPTH - 1   # internal nodes per tree (7)
L = 2 ** DEPTH       # leaves per tree (8)
TJ = NUM_TREES * J                 # 56 packed internal nodes
TJ_PAD = ((TJ + 15) // 16) * 16    # 64 (bf16 sublane-aligned)
TL = NUM_TREES * L                 # 64 packed leaves
TILE_N = 1024        # samples per grid step (lane-dense output tile)


# ------------------------------- Pallas kernel --------------------------------
def _gb_stage_kernel(x_ref, selT_ref, thrT_ref, pathT_ref, leafT_ref, outT_ref,
                     *, depth):
    # x tile arrives in its natural [TILE_N, F] layout; contract on F with the
    # one-hot selectors so all downstream tensors are transposed / lane-dense.
    nf = lax.dot_general(
        selT_ref[...], x_ref[...],
        dimension_numbers=(((1,), (1,)), ((), ())),
        preferred_element_type=jnp.float32)                            # [TJ_PAD, TILE_N]
    # sklearn split rule: go left iff x[feat] <= threshold.  +-1 is exact in bf16.
    s = jnp.where(nf <= thrT_ref[...], 1.0, -1.0).astype(jnp.bfloat16)  # [TJ_PAD, TILE_N]
    # leaf scoring: score == depth iff every on-path decision matches (bf16 MXU,
    # exact small-integer sums |score| <= depth).
    score = jnp.dot(pathT_ref[...], s,
                    preferred_element_type=jnp.float32)                # [TL, TILE_N]
    memb = jnp.where(score >= depth - 0.5, 1.0, 0.0)                   # one-hot per tree
    outT_ref[...] = jnp.dot(leafT_ref[...], memb,
                            preferred_element_type=jnp.float32
                            ).astype(outT_ref.dtype)                   # [T, TILE_N]


def gradient_boosting_stage(x, selT, thrT, pathT, leafT):
    """x: [N, F] f32 -> [N, NUM_TREES] f32 (matches the PyTorch module)."""
    n, f = x.shape
    tile_n = min(TILE_N, n)
    assert n % tile_n == 0
    kernel = functools.partial(_gb_stage_kernel, depth=DEPTH)
    outT = pl.pallas_call(
        kernel,
        out_shape=jax.ShapeDtypeStruct((NUM_TREES, n), jnp.float32),
        grid_spec=pltpu.PrefetchScalarGridSpec(
            num_scalar_prefetch=0,
            grid=(n // tile_n,),
            in_specs=[
                pl.BlockSpec((tile_n, f), lambda i: (i, 0)),           # x tile, native layout
                pl.BlockSpec((TJ_PAD, f), lambda i: (0, 0)),           # SEL_T  (full)
                pl.BlockSpec((TJ_PAD, 1), lambda i: (0, 0)),           # THR_T  (full)
                pl.BlockSpec((TL, TJ_PAD), lambda i: (0, 0)),          # PATH_T (full, bf16)
                pl.BlockSpec((NUM_TREES, TL), lambda i: (0, 0)),       # LEAF_T (full)
            ],
            out_specs=pl.BlockSpec((NUM_TREES, tile_n), lambda i: (0, i)),
        ),
        compiler_params=pltpu.CompilerParams(
            dimension_semantics=("parallel",)),  # sample axis has no carried state
    )(x, selT, thrT, pathT, leafT)
    # Transpose stays outside the kernel so the in-kernel store remains lane-dense.
    return jnp.transpose(outT)                                         # [N, NUM_TREES]


# -------------------- deterministic synthetic tree parameters -----------------
def build_tree_params(key):
    k_feat, k_thr, k_leaf = jax.random.split(key, 3)
    feat_idx = np.asarray(
        jax.random.randint(k_feat, (NUM_TREES, J), 0, F), dtype=np.int64)
    thresholds = np.asarray(
        jax.random.normal(k_thr, (NUM_TREES, J)), dtype=np.float32)
    leaf_values = np.asarray(
        jax.random.normal(k_leaf, (NUM_TREES, L)), dtype=np.float32)

    # signed path matrix for one complete binary tree of depth DEPTH:
    # path[j, l] = +1 (go left at node j on path to leaf l), -1 (right), 0 (off-path)
    path = np.zeros((J, L), dtype=np.float32)
    for l in range(L):
        node = 0
        for k in range(DEPTH):
            bit = (l >> (DEPTH - 1 - k)) & 1
            path[node, l] = 1.0 if bit == 0 else -1.0
            node = 2 * node + 1 + bit

    # Fused, transposed, block-diagonal parameters (zero-padded to TJ_PAD).
    assert path.shape == (J, L)  # complete-tree packing contract
    selT = np.zeros((TJ_PAD, F), dtype=np.float32)       # one-hot rows
    thrT = np.zeros((TJ_PAD, 1), dtype=np.float32)
    pathT = np.zeros((TL, TJ_PAD), dtype=np.float32)     # block-diagonal
    leafT = np.zeros((NUM_TREES, TL), dtype=np.float32)  # block-diagonal
    for t in range(NUM_TREES):
        for j in range(J):
            selT[t * J + j, feat_idx[t, j]] = 1.0
            thrT[t * J + j, 0] = thresholds[t, j]
        pathT[t * L:(t + 1) * L, t * J:(t + 1) * J] = path.T
        leafT[t, t * L:(t + 1) * L] = leaf_values[t]
    # Padded node columns (TJ..TJ_PAD-1) of pathT are zero, so whatever sign the
    # padded rows of `s` take, they contribute nothing to the score.

    return feat_idx, thresholds, leaf_values, selT, thrT, pathT, leafT


def reference_forward(x, feat_idx, thresholds, leaf_values):
    """Pure-numpy per-sample tree traversal (ground truth)."""
    x = np.asarray(x)
    n = x.shape[0]
    out = np.zeros((n, NUM_TREES), dtype=np.float32)
    for t in range(NUM_TREES):
        for i in range(n):
            node = 0
            for _ in range(DEPTH):
                f = feat_idx[t, node]
                if x[i, f] <= thresholds[t, node]:
                    node = 2 * node + 1
                else:
                    node = 2 * node + 2
            out[i, t] = leaf_values[t, node - J]
    return out


# ------------------------------------ main -------------------------------------
if __name__ == "__main__":
    key = jax.random.PRNGKey(0)
    k_x, k_tree = jax.random.split(key)

    x = jax.random.normal(k_x, (N, F), dtype=jnp.float32)
    feat_idx, thresholds, leaf_values, selT, thrT, pathT, leafT = \
        build_tree_params(k_tree)

    out = gradient_boosting_stage(
        x,
        jnp.asarray(selT, dtype=jnp.float32),
        jnp.asarray(thrT, dtype=jnp.float32),
        jnp.asarray(pathT, dtype=jnp.bfloat16),   # +-1/0 exact in bf16
        jnp.asarray(leafT, dtype=jnp.float32))
    out = jax.block_until_ready(out)

    ref = reference_forward(np.asarray(x), feat_idx, thresholds, leaf_values)
    np.testing.assert_allclose(np.asarray(out), ref, rtol=1e-5, atol=1e-5)

    print("KERNEL_OK")
</pallas_src>

<mosaic_0001>
module attributes {stable_mosaic.version = 11 : i64} {
  func.func @_gb_stage_kernel(%arg0: i32, %arg1: memref<1024x16xf32, #tpu.memory_space<vmem>>, %arg2: memref<64x16xf32, #tpu.memory_space<vmem>>, %arg3: memref<64x1xf32, #tpu.memory_space<vmem>>, %arg4: memref<64x64xbf16, #tpu.memory_space<vmem>>, %arg5: memref<8x64xf32, #tpu.memory_space<vmem>>, %arg6: memref<8x1024xf32, #tpu.memory_space<vmem>>) attributes {dimension_semantics = [#tpu.dimension_semantics<parallel>], iteration_bounds = array<i64: 2>, scalar_prefetch = 0 : i64, scratch_operands = 0 : i64, tpu.core_type = #tpu.core_type<tc>, window_params = [{transform_indices = @transform_0, window_bounds = array<i64: 1024, 16>}, {pipeline_mode = #tpu.pipeline_mode<synchronous>, transform_indices = @transform_1, window_bounds = array<i64: 64, 16>}, {pipeline_mode = #tpu.pipeline_mode<synchronous>, transform_indices = @transform_2, window_bounds = array<i64: 64, 1>}, {pipeline_mode = #tpu.pipeline_mode<synchronous>, transform_indices = @transform_3, window_bounds = array<i64: 64, 64>}, {pipeline_mode = #tpu.pipeline_mode<synchronous>, transform_indices = @transform_4, window_bounds = array<i64: 8, 64>}, {transform_indices = @transform_5, window_bounds = array<i64: 8, 1024>}]} {
    %c0 = arith.constant 0 : index
    %c0_0 = arith.constant 0 : index
    %0 = vector.load %arg2[%c0, %c0_0] : memref<64x16xf32, #tpu.memory_space<vmem>>, vector<64x16xf32>
    %c0_1 = arith.constant 0 : index
    %c0_2 = arith.constant 0 : index
    %1 = vector.load %arg1[%c0_1, %c0_2] : memref<1024x16xf32, #tpu.memory_space<vmem>>, vector<1024x16xf32>
    %cst = arith.constant dense<0.000000e+00> : vector<64x1024xf32>
    %2 = tpu.matmul %0, %1, %cst {dimension_numbers = #tpu.dot_dimension_numbers<[1], [1], [0], [0], [0, 0, 1, 0], [], []>} : vector<64x16xf32>, vector<1024x16xf32>, vector<64x1024xf32> -> vector<64x1024xf32>
    %c0_3 = arith.constant 0 : index
    %c0_4 = arith.constant 0 : index
    %3 = vector.load %arg3[%c0_3, %c0_4] : memref<64x1xf32, #tpu.memory_space<vmem>>, vector<64x1xf32>
    %4 = vector.broadcast %3 : vector<64x1xf32> to vector<64x1024xf32>
    %5 = arith.cmpf ole, %2, %4 : vector<64x1024xf32>
    %cst_5 = arith.constant 1.000000e+00 : f32
    %cst_6 = arith.constant -1.000000e+00 : f32
    %6 = vector.broadcast %cst_5 : f32 to vector<64x1024xf32>
    %7 = vector.broadcast %cst_6 : f32 to vector<64x1024xf32>
    %8 = arith.select %5, %6, %7 : vector<64x1024xi1>, vector<64x1024xf32>
    %9 = arith.truncf %8 : vector<64x1024xf32> to vector<64x1024xbf16>
    %c0_7 = arith.constant 0 : index
    %c0_8 = arith.constant 0 : index
    %10 = vector.load %arg4[%c0_7, %c0_8] : memref<64x64xbf16, #tpu.memory_space<vmem>>, vector<64x64xbf16>
    %cst_9 = arith.constant dense<0.000000e+00> : vector<64x1024xf32>
    %11 = tpu.matmul %10, %9, %cst_9 {dimension_numbers = #tpu.dot_dimension_numbers<[1], [0], [0], [1], [0, 0, 1, 1], [], []>} : vector<64x64xbf16>, vector<64x1024xbf16>, vector<64x1024xf32> -> vector<64x1024xf32>
    %cst_10 = arith.constant 2.500000e+00 : f32
    %12 = vector.broadcast %cst_10 : f32 to vector<64x1024xf32>
    %13 = arith.cmpf oge, %11, %12 : vector<64x1024xf32>
    %cst_11 = arith.constant 1.000000e+00 : f32
    %cst_12 = arith.constant 0.000000e+00 : f32
    %14 = vector.broadcast %cst_11 : f32 to vector<64x1024xf32>
    %15 = vector.broadcast %cst_12 : f32 to vector<64x1024xf32>
    %16 = arith.select %13, %14, %15 : vector<64x1024xi1>, vector<64x1024xf32>
    %c0_13 = arith.constant 0 : index
    %c0_14 = arith.constant 0 : index
    %17 = vector.load %arg5[%c0_13, %c0_14] : memref<8x64xf32, #tpu.memory_space<vmem>>, vector<8x64xf32>
    %cst_15 = arith.constant dense<0.000000e+00> : vector<8x1024xf32>
    %18 = tpu.matmul %17, %16, %cst_15 {dimension_numbers = #tpu.dot_dimension_numbers<[1], [0], [0], [1], [0, 0, 1, 1], [], []>} : vector<8x64xf32>, vector<64x1024xf32>, vector<8x1024xf32> -> vector<8x1024xf32>
    %c0_16 = arith.constant 0 : index
    %c0_17 = arith.constant 0 : index
    %19 = vector.load %arg6[%c0_16, %c0_17] : memref<8x1024xf32, #tpu.memory_space<vmem>>, vector<8x1024xf32>
    tpu.vector_store %arg6[%c0_16, %c0_17], %18 {strides = array<i32>} : memref<8x1024xf32, #tpu.memory_space<vmem>>, vector<8x1024xf32>,
    return
  }
  func.func @transform_0(%arg0: i32) -> (i32, i32) {
    %c0_i32 = arith.constant 0 : i32
    %c0_i32_0 = arith.constant 0 : i32
    return %arg0, %c0_i32 : i32, i32
  }
  func.func @transform_1(%arg0: i32) -> (i32, i32) {
    %c0_i32 = arith.constant 0 : i32
    %c0_i32_0 = arith.constant 0 : i32
    %c0_i32_1 = arith.constant 0 : i32
    return %c0_i32, %c0_i32_0 : i32, i32
  }
  func.func @transform_2(%arg0: i32) -> (i32, i32) {
    %c0_i32 = arith.constant 0 : i32
    %c0_i32_0 = arith.constant 0 : i32
    %c0_i32_1 = arith.constant 0 : i32
    return %c0_i32, %c0_i32_0 : i32, i32
  }
  func.func @transform_3(%arg0: i32) -> (i32, i32) {
    %c0_i32 = arith.constant 0 : i32
    %c0_i32_0 = arith.constant 0 : i32
    %c0_i32_1 = arith.constant 0 : i32
    return %c0_i32, %c0_i32_0 : i32, i32
  }
  func.func @transform_4(%arg0: i32) -> (i32, i32) {
    %c0_i32 = arith.constant 0 : i32
    %c0_i32_0 = arith.constant 0 : i32
    %c0_i32_1 = arith.constant 0 : i32
    return %c0_i32, %c0_i32_0 : i32, i32
  }
  func.func @transform_5(%arg0: i32) -> (i32, i32) {
    %c0_i32 = arith.constant 0 : i32
    %c0_i32_0 = arith.constant 0 : i32
    return %c0_i32, %arg0 : i32, i32
  }
}

</mosaic_0001>

<llo_original>
// kernel: tpu_custom_call.1
$region0: #{tpu_custom_call.1}
  #allocation0 [shape = 'u32[]', space=smem, size = 0x4, offset = 0x4, fixed_abs, tag = 'smem constant byte address 0x4 - core index']
  #allocation1 [shape = 'u32[72,128]{1,0:T(1,128)}', space=vmem, size = 0x9000, scoped, tag = 'internal scratch']
  %s0 = inlined_call_operand.vmem [shape: f32[2048,16], index: 0, kind: input, shape index: {}]
  %s1 = inlined_call_operand.vmem [shape: f32[64,16], index: 1, kind: input, shape index: {}]
  %s2 = inlined_call_operand.vmem [shape: f32[64,1], index: 2, kind: input, shape index: {}]
  %s3 = inlined_call_operand.vmem [shape: bf16[64,64], index: 3, kind: input, shape index: {}]
  %s4 = inlined_call_operand.vmem [shape: f32[8,64], index: 4, kind: input, shape index: {}]
  %s5 = inlined_call_operand.hbm [shape: f32[8,2048], index: 5, kind: output, shape index: {}]
  %s6 = sld [smem:[#allocation0]]
  $region53: #{tpu_custom_call.1} parent=0
    _
  %s8 = ssub.s32 1, %s6
  %s9 = scalar_select 0, %s8, %s6
  $region1: #{tpu_custom_call.1} parent=0
    #allocation2 [shape = 'u8[65536]{0}', space=vmem, size = 0x10000, scoped, tag = 'output window, operand 0']
    #allocation3 [shape = 's32[2]{0}', space=sflag, size = 0x8, scoped, tag = 'scoped memory for tpu_custom_call.1']
    %10 = vsyncpa [#allocation3], 0
    %s11 = scalar_lea.sflag [#allocation3], 1
    %12 = vsyncpa %s11, 0
    loop: start=0, step=1, limit=4
    $region2: #{tpu_custom_call.1} parent=1 // loop_pre_header
      _
    $region3: #{tpu_custom_call.1} parent=1 // loop_header
      %s14 = sphi 0, %s18
      %p15 = scmp.ge.s32.totalorder %s14, 4
      %s24 = sphi 0, %s26
      %s27 = sphi 0, %s24
      %s28 = sphi 0, %s27
      %s44 = sphi 0, %s28
      %s48 = sphi 0, %s48
      %s50 = sphi 0, %s48
      %s51 = sphi 0, %s50
      %s65 = sphi 0, %s51
      %s69 = sphi 0, %s69
      %s71 = sphi 0, %s69
      %s72 = sphi 0, %s71
      %s86 = sphi 0, %s72
      %s90 = sphi 0, %s90
      %s92 = sphi 0, %s90
      %s93 = sphi 0, %s92
      %s107 = sphi 0, %s93
      %s111 = sphi 0, %s111
      %s113 = sphi 0, %s111
      %s114 = sphi 0, %s113
      %s128 = sphi 0, %s114
      %s134 = sphi 0, %s136
      %s137 = sphi 0, %s134
      %s138 = sphi 0, %s137
      %s154 = sphi 0, %s138
    $region4: #{tpu_custom_call.1} parent=1 // loop_header_branch
      %17 = sbr.rel (%p15) target = $region8
    $region5: #{tpu_custom_call.1} parent=1 // loop_body
      %s19 = ssub.s32 %s14, 1
      %s20 = ssub.s32 %s14, 2
      %s21 = sadd.s32 %s14, 1
      %s22 = ssub.s32 %s14, %s21
      %p23 = scmp.eq.s32.totalorder %s22, 0
      %s25 = sadd.s32 %s24, 1
      %s26 = scalar_select %p23, %s24, %s25
      %p29 = pneg %p23
      %p30 = scmp.eq.s32.totalorder %s14, 1
      %p31 = por %p29, %p30
      %p32 = scmp.ne.s32.totalorder %s24, %s27
      %p33 = scmp.eq.s32.totalorder %s14, 0
      %p34 = por %p32, %p33
      %p35 = scmp.ne.s32.totalorder %s24, %s27
      %p36 = scmp.eq.s32.totalorder %s19, 1
      %p37 = por %p35, %p36
      %p38 = scmp.ne.s32.totalorder %s27, %s28
      %p39 = scmp.eq.s32.totalorder %s19, 0
      %p40 = por %p38, %p39
      %p41 = scmp.ne.s32.totalorder %s27, %s28
      %p42 = scmp.eq.s32.totalorder %s20, 1
      %p43 = por %p41, %p42
      %p45 = scmp.ne.s32.totalorder %s28, %s44
      %p46 = scmp.eq.s32.totalorder %s20, 0
      %p47 = por %p45, %p46
      %s49 = sadd.s32 %s48, 1
      %p52 = scmp.eq.s32.totalorder %s14, 1
      %p53 = scmp.ne.s32.totalorder %s48, %s50
      %p54 = scmp.eq.s32.totalorder %s14, 0
      %p55 = por %p53, %p54
      %p56 = scmp.ne.s32.totalorder %s48, %s50
      %p57 = scmp.eq.s32.totalorder %s19, 1
      %p58 = por %p56, %p57
      %p59 = scmp.ne.s32.totalorder %s50, %s51
      %p60 = scmp.eq.s32.totalorder %s19, 0
      %p61 = por %p59, %p60
      %p62 = scmp.ne.s32.totalorder %s50, %s51
      %p63 = scmp.eq.s32.totalorder %s20, 1
      %p64 = por %p62, %p63
      %p66 = scmp.ne.s32.totalorder %s51, %s65
      %p67 = scmp.eq.s32.totalorder %s20, 0
      %p68 = por %p66, %p67
      %s70 = sadd.s32 %s69, 1
      %p73 = scmp.eq.s32.totalorder %s14, 1
      %p74 = scmp.ne.s32.totalorder %s69, %s71
      %p75 = scmp.eq.s32.totalorder %s14, 0
      %p76 = por %p74, %p75
      %p77 = scmp.ne.s32.totalorder %s69, %s71
      %p78 = scmp.eq.s32.totalorder %s19, 1
      %p79 = por %p77, %p78
      %p80 = scmp.ne.s32.totalorder %s71, %s72
      %p81 = scmp.eq.s32.totalorder %s19, 0
      %p82 = por %p80, %p81
      %p83 = scmp.ne.s32.totalorder %s71, %s72
      %p84 = scmp.eq.s32.totalorder %s20, 1
      %p85 = por %p83, %p84
      %p87 = scmp.ne.s32.totalorder %s72, %s86
      %p88 = scmp.eq.s32.totalorder %s20, 0
      %p89 = por %p87, %p88
      %s91 = sadd.s32 %s90, 1
      %p94 = scmp.eq.s32.totalorder %s14, 1
      %p95 = scmp.ne.s32.totalorder %s90, %s92
      %p96 = scmp.eq.s32.totalorder %s14, 0
      %p97 = por %p95, %p96
      %p98 = scmp.ne.s32.totalorder %s90, %s92
      %p99 = scmp.eq.s32.totalorder %s19, 1
      %p100 = por %p98, %p99
      %p101 = scmp.ne.s32.totalorder %s92, %s93
      %p102 = scmp.eq.s32.totalorder %s19, 0
      %p103 = por %p101, %p102
      %p104 = scmp.ne.s32.totalorder %s92, %s93
      %p105 = scmp.eq.s32.totalorder %s20, 1
      %p106 = por %p104, %p105
      %p108 = scmp.ne.s32.totalorder %s93, %s107
      %p109 = scmp.eq.s32.totalorder %s20, 0
      %p110 = por %p108, %p109
      %s112 = sadd.s32 %s111, 1
      %p115 = scmp.eq.s32.totalorder %s14, 1
      %p116 = scmp.ne.s32.totalorder %s111, %s113
      %p117 = scmp.eq.s32.totalorder %s14, 0
      %p118 = por %p116, %p117
      %p119 = scmp.ne.s32.totalorder %s111, %s113
      %p120 = scmp.eq.s32.totalorder %s19, 1
      %p121 = por %p119, %p120
      %p122 = scmp.ne.s32.totalorder %s113, %s114
      %p123 = scmp.eq.s32.totalorder %s19, 0
      %p124 = por %p122, %p123
      %p125 = scmp.ne.s32.totalorder %s113, %s114
      %p126 = scmp.eq.s32.totalorder %s20, 1
      %p127 = por %p125, %p126
      %p129 = scmp.ne.s32.totalorder %s114, %s128
      %p130 = scmp.eq.s32.totalorder %s20, 0
      %p131 = por %p129, %p130
      %s132 = ssub.s32 %s14, %s21
      %p133 = scmp.eq.s32.totalorder %s132, 0
      %s135 = sadd.s32 %s134, 1
      %s136 = scalar_select %p133, %s134, %s135
      %p139 = pneg %p133
      %p140 = scmp.eq.s32.totalorder %s14, 1
      %p141 = por %p139, %p140
      %p142 = scmp.ne.s32.totalorder %s134, %s137
      %p143 = scmp.eq.s32.totalorder %s14, 0
      %p144 = por %p142, %p143
      %p145 = scmp.ne.s32.totalorder %s134, %s137
      %p146 = scmp.eq.s32.totalorder %s19, 1
      %p147 = por %p145, %p146
      %p148 = scmp.ne.s32.totalorder %s137, %s138
      %p149 = scmp.eq.s32.totalorder %s19, 0
      %p150 = por %p148, %p149
      %p151 = scmp.ne.s32.totalorder %s137, %s138
      %p152 = scmp.eq.s32.totalorder %s20, 1
      %p153 = por %p151, %p152
      %p155 = scmp.ne.s32.totalorder %s138, %s154
      %p156 = scmp.eq.s32.totalorder %s20, 0
      %p157 = por %p155, %p156
      %p158 = scmp.le.s32.totalorder 1, %s14
      %p159 = scmp.lt.s32.totalorder %s14, 3
      %p160 = pnand %p158, %p159
      %p161 = pneg %p160
      // Predicated region
      $region9: #{tpu_custom_call.1} parent=5 // pred_check
        _
      $region10: #{tpu_custom_call.1} parent=5 // pred_check_branch
        %163 = sbr.rel (%p160) target = $region12
      $region11: #{tpu_custom_call.1} parent=5 // pred_region
        %s164 = ssub.s32 %s14, 1
        // Predicated region
        $region13: #{tpu_custom_call.1} parent=11 // pred_check
          %p165 = pneg %p61
        $region14: #{tpu_custom_call.1} parent=11 // pred_check_branch
          %167 = sbr.rel (%p165) target = $region16
        $region15: #{tpu_custom_call.1} parent=11 // pred_region
          _
        $region16: #{tpu_custom_call.1} parent=11 // pred_fallthru
          _
        // Predicated region
        $region17: #{tpu_custom_call.1} parent=11 // pred_check
          %p168 = pneg %p82
        $region18: #{tpu_custom_call.1} parent=11 // pred_check_branch
          %170 = sbr.rel (%p168) target = $region20
        $region19: #{tpu_custom_call.1} parent=11 // pred_region
          _
        $region20: #{tpu_custom_call.1} parent=11 // pred_fallthru
          _
        // Predicated region
        $region21: #{tpu_custom_call.1} parent=11 // pred_check
          %p171 = pneg %p103
        $region22: #{tpu_custom_call.1} parent=11 // pred_check_branch
          %173 = sbr.rel (%p171) target = $region24
        $region23: #{tpu_custom_call.1} parent=11 // pred_region
          _
        $region24: #{tpu_custom_call.1} parent=11 // pred_fallthru
          _
        // Predicated region
        $region25: #{tpu_custom_call.1} parent=11 // pred_check
          %p174 = pneg %p124
        $region26: #{tpu_custom_call.1} parent=11 // pred_check_branch
          %176 = sbr.rel (%p174) target = $region28
        $region27: #{tpu_custom_call.1} parent=11 // pred_region
          _
        $region28: #{tpu_custom_call.1} parent=11 // pred_fallthru
          _
      $region12: #{tpu_custom_call.1} parent=5 // pred_fallthru
        _
      %p177 = scmp.lt.s32.totalorder %s14, 2
      // Predicated region
      $region29: #{tpu_custom_call.1} parent=5 // pred_check
        %p178 = pneg %p177
      $region30: #{tpu_custom_call.1} parent=5 // pred_check_branch
        %180 = sbr.rel (%p178) target = $region32
      $region31: #{tpu_custom_call.1} parent=5 // pred_region
        // Predicated region
        $region33: #{tpu_custom_call.1} parent=31 // pred_check
          %p181 = pneg %p34
        $region34: #{tpu_custom_call.1} parent=31 // pred_check_branch
          %183 = sbr.rel (%p181) target = $region36
        $region35: #{tpu_custom_call.1} parent=31 // pred_region
          %s184 = smul.u32 128, %s14
          %p185 = scmp.lt.s32.totalorder %s184, 255
          %s186 = scalar_select %p185, %s184, 255
          %s187 = smul.addr %s186, 8
          %s188 = scalar_lea.vmem %s0, %s187
          %s189 = smul.u32 128, %s14
        $region36: #{tpu_custom_call.1} parent=31 // pred_fallthru
          _
      $region32: #{tpu_custom_call.1} parent=5 // pred_fallthru
        _
      %p190 = scmp.le.s32.totalorder 1, %s14
      %p191 = scmp.lt.s32.totalorder %s14, 3
      %p192 = pnand %p190, %p191
      %p193 = pneg %p192
      // Predicated region
      $region37: #{tpu_custom_call.1} parent=5 // pred_check
        _
      $region38: #{tpu_custom_call.1} parent=5 // pred_check_branch
        %195 = sbr.rel (%p192) target = $region40
      $region39: #{tpu_custom_call.1} parent=5 // pred_region
        %s196 = ssub.s32 %s14, 1
        %s197 = smul.u32 128, %s19
        %p198 = scmp.lt.s32.totalorder %s197, 255
        %s199 = scalar_select %p198, %s197, 255
        %s200 = smul.addr %s199, 8
        %s201 = scalar_lea.vmem %s0, %s200
        %p202 = pneg %p40
        %p203 = pneg %p37
        %p204 = pneg %p61
        %p205 = pneg %p58
        %p206 = pneg %p82
        %p207 = pneg %p79
        %p208 = pneg %p103
        %p209 = pneg %p100
        %p210 = pneg %p124
        %p211 = pneg %p121
        %p212 = pneg %p150
        %p213 = pneg %p147
        %s214 = sand.u32 %s137, 1
        %s215 = scalar_lea.sflag [#allocation3], %s214
        %s216 = sand.u32 %s137, 1
        %s217 = smul.addr %s216, 64
        %s218 = scalar_lea.vmem [#allocation2], %s217
        %s219 = smul.u32 128, %s19
        %p220 = scmp.lt.s32.totalorder %s219, 255
        %s221 = scalar_select %p220, %s219, 255
        %s222 = smul.addr %s221, 8
        %s223 = scalar_lea.vmem %s0, %s222
        %s224 = smul.u32 128, %s19
        %s225 = smul.u32 8, %s19
        %v227 = vld [vmem:[%s1] sm:$0xff]
        %v228 = vld [vmem:[%s1 + $0x8] sm:$0xff]
        %v229 = vld [vmem:[%s1 + $0x10] sm:$0xff]
        %v230 = vld [vmem:[%s1 + $0x18] sm:$0xff]
        %v231 = vld [vmem:[%s1 + $0x20] sm:$0xff]
        %v232 = vld [vmem:[%s1 + $0x28] sm:$0xff]
        %v233 = vld [vmem:[%s1 + $0x30] sm:$0xff]
        %v234 = vld [vmem:[%s1 + $0x38] sm:$0xff]
        %v235 = vld [vmem:[%s223] sm:$0xff]
        %v236 = vld [vmem:[%s223 + $0x8] sm:$0xff]
        %v237 = vld [vmem:[%s223 + $0x10] sm:$0xff]
        %v238 = vld [vmem:[%s223 + $0x18] sm:$0xff]
        %v239 = vld [vmem:[%s223 + $0x20] sm:$0xff]
        %v240 = vld [vmem:[%s223 + $0x28] sm:$0xff]
        %v241 = vld [vmem:[%s223 + $0x30] sm:$0xff]
        %v242 = vld [vmem:[%s223 + $0x38] sm:$0xff]
        %v243 = vld [vmem:[%s223 + $0x40] sm:$0xff]
        %v244 = vld [vmem:[%s223 + $0x48] sm:$0xff]
        %v245 = vld [vmem:[%s223 + $0x50] sm:$0xff]
        %v246 = vld [vmem:[%s223 + $0x58] sm:$0xff]
        %v247 = vld [vmem:[%s223 + $0x60] sm:$0xff]
        %v248 = vld [vmem:[%s223 + $0x68] sm:$0xff]
        %v249 = vld [vmem:[%s223 + $0x70] sm:$0xff]
        %v250 = vld [vmem:[%s223 + $0x78] sm:$0xff]
        %v251 = vld [vmem:[%s223 + $0x80] sm:$0xff]
        %v252 = vld [vmem:[%s223 + $0x88] sm:$0xff]
        %v253 = vld [vmem:[%s223 + $0x90] sm:$0xff]
        %v254 = vld [vmem:[%s223 + $0x98] sm:$0xff]
        %v255 = vld [vmem:[%s223 + $0xa0] sm:$0xff]
        %v256 = vld [vmem:[%s223 + $0xa8] sm:$0xff]
        %v257 = vld [vmem:[%s223 + $0xb0] sm:$0xff]
        %v258 = vld [vmem:[%s223 + $0xb8] sm:$0xff]
        %v259 = vld [vmem:[%s223 + $0xc0] sm:$0xff]
        %v260 = vld [vmem:[%s223 + $0xc8] sm:$0xff]
        %v261 = vld [vmem:[%s223 + $0xd0] sm:$0xff]
        %v262 = vld [vmem:[%s223 + $0xd8] sm:$0xff]
        %v263 = vld [vmem:[%s223 + $0xe0] sm:$0xff]
        %v264 = vld [vmem:[%s223 + $0xe8] sm:$0xff]
        %v265 = vld [vmem:[%s223 + $0xf0] sm:$0xff]
        %v266 = vld [vmem:[%s223 + $0xf8] sm:$0xff]
        %v267 = vld [vmem:[%s223 + $0x100] sm:$0xff]
        %v268 = vld [vmem:[%s223 + $0x108] sm:$0xff]
        %v269 = vld [vmem:[%s223 + $0x110] sm:$0xff]
        %v270 = vld [vmem:[%s223 + $0x118] sm:$0xff]
        %v271 = vld [vmem:[%s223 + $0x120] sm:$0xff]
        %v272 = vld [vmem:[%s223 + $0x128] sm:$0xff]
        %v273 = vld [vmem:[%s223 + $0x130] sm:$0xff]
        %v274 = vld [vmem:[%s223 + $0x138] sm:$0xff]
        %v275 = vld [vmem:[%s223 + $0x140] sm:$0xff]
        %v276 = vld [vmem:[%s223 + $0x148] sm:$0xff]
        %v277 = vld [vmem:[%s223 + $0x150] sm:$0xff]
        %v278 = vld [vmem:[%s223 + $0x158] sm:$0xff]
        %v279 = vld [vmem:[%s223 + $0x160] sm:$0xff]
        %v280 = vld [vmem:[%s223 + $0x168] sm:$0xff]
        %v281 = vld [vmem:[%s223 + $0x170] sm:$0xff]
        %v282 = vld [vmem:[%s223 + $0x178] sm:$0xff]
        %v283 = vld [vmem:[%s223 + $0x180] sm:$0xff]
        %v284 = vld [vmem:[%s223 + $0x188] sm:$0xff]
        %v285 = vld [vmem:[%s223 + $0x190] sm:$0xff]
        %v286 = vld [vmem:[%s223 + $0x198] sm:$0xff]
        %v287 = vld [vmem:[%s223 + $0x1a0] sm:$0xff]
        %v288 = vld [vmem:[%s223 + $0x1a8] sm:$0xff]
        %v289 = vld [vmem:[%s223 + $0x1b0] sm:$0xff]
        %v290 = vld [vmem:[%s223 + $0x1b8] sm:$0xff]
        %v291 = vld [vmem:[%s223 + $0x1c0] sm:$0xff]
        %v292 = vld [vmem:[%s223 + $0x1c8] sm:$0xff]
        %v293 = vld [vmem:[%s223 + $0x1d0] sm:$0xff]
        %v294 = vld [vmem:[%s223 + $0x1d8] sm:$0xff]
        %v295 = vld [vmem:[%s223 + $0x1e0] sm:$0xff]
        %v296 = vld [vmem:[%s223 + $0x1e8] sm:$0xff]
        %v297 = vld [vmem:[%s223 + $0x1f0] sm:$0xff]
        %v298 = vld [vmem:[%s223 + $0x1f8] sm:$0xff]
        %v299 = vld [vmem:[%s223 + $0x200] sm:$0xff]
        %v300 = vld [vmem:[%s223 + $0x208] sm:$0xff]
        %v301 = vld [vmem:[%s223 + $0x210] sm:$0xff]
        %v302 = vld [vmem:[%s223 + $0x218] sm:$0xff]
        %v303 = vld [vmem:[%s223 + $0x220] sm:$0xff]
        %v304 = vld [vmem:[%s223 + $0x228] sm:$0xff]
        %v305 = vld [vmem:[%s223 + $0x230] sm:$0xff]
        %v306 = vld [vmem:[%s223 + $0x238] sm:$0xff]
        %v307 = vld [vmem:[%s223 + $0x240] sm:$0xff]
        %v308 = vld [vmem:[%s223 + $0x248] sm:$0xff]
        %v309 = vld [vmem:[%s223 + $0x250] sm:$0xff]
        %v310 = vld [vmem:[%s223 + $0x258] sm:$0xff]
        %v311 = vld [vmem:[%s223 + $0x260] sm:$0xff]
        %v312 = vld [vmem:[%s223 + $0x268] sm:$0xff]
        %v313 = vld [vmem:[%s223 + $0x270] sm:$0xff]
        %v314 = vld [vmem:[%s223 + $0x278] sm:$0xff]
        %v315 = vld [vmem:[%s223 + $0x280] sm:$0xff]
        %v316 = vld [vmem:[%s223 + $0x288] sm:$0xff]
        %v317 = vld [vmem:[%s223 + $0x290] sm:$0xff]
        %v318 = vld [vmem:[%s223 + $0x298] sm:$0xff]
        %v319 = vld [vmem:[%s223 + $0x2a0] sm:$0xff]
        %v320 = vld [vmem:[%s223 + $0x2a8] sm:$0xff]
        %v321 = vld [vmem:[%s223 + $0x2b0] sm:$0xff]
        %v322 = vld [vmem:[%s223 + $0x2b8] sm:$0xff]
        %v323 = vld [vmem:[%s223 + $0x2c0] sm:$0xff]
        %v324 = vld [vmem:[%s223 + $0x2c8] sm:$0xff]
        %v325 = vld [vmem:[%s223 + $0x2d0] sm:$0xff]
        %v326 = vld [vmem:[%s223 + $0x2d8] sm:$0xff]
        %v327 = vld [vmem:[%s223 + $0x2e0] sm:$0xff]
        %v328 = vld [vmem:[%s223 + $0x2e8] sm:$0xff]
        %v329 = vld [vmem:[%s223 + $0x2f0] sm:$0xff]
        %v330 = vld [vmem:[%s223 + $0x2f8] sm:$0xff]
        %v331 = vld [vmem:[%s223 + $0x300] sm:$0xff]
        %v332 = vld [vmem:[%s223 + $0x308] sm:$0xff]
        %v333 = vld [vmem:[%s223 + $0x310] sm:$0xff]
        %v334 = vld [vmem:[%s223 + $0x318] sm:$0xff]
        %v335 = vld [vmem:[%s223 + $0x320] sm:$0xff]
        %v336 = vld [vmem:[%s223 + $0x328] sm:$0xff]
        %v337 = vld [vmem:[%s223 + $0x330] sm:$0xff]
        %v338 = vld [vmem:[%s223 + $0x338] sm:$0xff]
        %v339 = vld [vmem:[%s223 + $0x340] sm:$0xff]
        %v340 = vld [vmem:[%s223 + $0x348] sm:$0xff]
        %v341 = vld [vmem:[%s223 + $0x350] sm:$0xff]
        %v342 = vld [vmem:[%s223 + $0x358] sm:$0xff]
        %v343 = vld [vmem:[%s223 + $0x360] sm:$0xff]
        %v344 = vld [vmem:[%s223 + $0x368] sm:$0xff]
        %v345 = vld [vmem:[%s223 + $0x370] sm:$0xff]
        %v346 = vld [vmem:[%s223 + $0x378] sm:$0xff]
        %v347 = vld [vmem:[%s223 + $0x380] sm:$0xff]
        %v348 = vld [vmem:[%s223 + $0x388] sm:$0xff]
        %v349 = vld [vmem:[%s223 + $0x390] sm:$0xff]
        %v350 = vld [vmem:[%s223 + $0x398] sm:$0xff]
        %v351 = vld [vmem:[%s223 + $0x3a0] sm:$0xff]
        %v352 = vld [vmem:[%s223 + $0x3a8] sm:$0xff]
        %v353 = vld [vmem:[%s223 + $0x3b0] sm:$0xff]
        %v354 = vld [vmem:[%s223 + $0x3b8] sm:$0xff]
        %v355 = vld [vmem:[%s223 + $0x3c0] sm:$0xff]
        %v356 = vld [vmem:[%s223 + $0x3c8] sm:$0xff]
        %v357 = vld [vmem:[%s223 + $0x3d0] sm:$0xff]
        %v358 = vld [vmem:[%s223 + $0x3d8] sm:$0xff]
        %v359 = vld [vmem:[%s223 + $0x3e0] sm:$0xff]
        %v360 = vld [vmem:[%s223 + $0x3e8] sm:$0xff]
        %v361 = vld [vmem:[%s223 + $0x3f0] sm:$0xff]
        %v362 = vld [vmem:[%s223 + $0x3f8] sm:$0xff]
        %vm363 = vcmask 130048
        %v365 = vsel %vm363, %v227, 0
        %v368 = vsel %vm363, %v228, 0
        %v371 = vsel %vm363, %v229, 0
        %v374 = vsel %vm363, %v230, 0
        %v377 = vsel %vm363, %v231, 0
        %v380 = vsel %vm363, %v232, 0
        %v383 = vsel %vm363, %v233, 0
        %v386 = vsel %vm363, %v234, 0
        %v389 = vsel %vm363, %v235, 0
        %v392 = vsel %vm363, %v236, 0
        %v395 = vsel %vm363, %v237, 0
        %v398 = vsel %vm363, %v238, 0
        %v401 = vsel %vm363, %v239, 0
        %v404 = vsel %vm363, %v240, 0
        %v407 = vsel %vm363, %v241, 0
        %v410 = vsel %vm363, %v242, 0
        %v413 = vsel %vm363, %v243, 0
        %v416 = vsel %vm363, %v244, 0
        %v419 = vsel %vm363, %v245, 0
        %v422 = vsel %vm363, %v246, 0
        %v425 = vsel %vm363, %v247, 0
        %v428 = vsel %vm363, %v248, 0
        %v431 = vsel %vm363, %v249, 0
        %v434 = vsel %vm363, %v250, 0
        %v437 = vsel %vm363, %v251, 0
        %v440 = vsel %vm363, %v252, 0
        %v443 = vsel %vm363, %v253, 0
        %v446 = vsel %vm363, %v254, 0
        %v449 = vsel %vm363, %v255, 0
        %v452 = vsel %vm363, %v256, 0
        %v455 = vsel %vm363, %v257, 0
        %v458 = vsel %vm363, %v258, 0
        %v461 = vsel %vm363, %v259, 0
        %v464 = vsel %vm363, %v260, 0
        %v467 = vsel %vm363, %v261, 0
        %v470 = vsel %vm363, %v262, 0
        %v473 = vsel %vm363, %v263, 0
        %v476 = vsel %vm363, %v264, 0
        %v479 = vsel %vm363, %v265, 0
        %v482 = vsel %vm363, %v266, 0
        %v485 = vsel %vm363, %v267, 0
        %v488 = vsel %vm363, %v268, 0
        %v491 = vsel %vm363, %v269, 0
        %v494 = vsel %vm363, %v270, 0
        %v497 = vsel %vm363, %v271, 0
        %v500 = vsel %vm363, %v272, 0
        %v503 = vsel %vm363, %v273, 0
        %v506 = vsel %vm363, %v274, 0
        %v509 = vsel %vm363, %v275, 0
        %v512 = vsel %vm363, %v276, 0
        %v515 = vsel %vm363, %v277, 0
        %v518 = vsel %vm363, %v278, 0
        %v521 = vsel %vm363, %v279, 0
        %v524 = vsel %vm363, %v280, 0
        %v527 = vsel %vm363, %v281, 0
        %v530 = vsel %vm363, %v282, 0
        %v533 = vsel %vm363, %v283, 0
        %v536 = vsel %vm363, %v284, 0
        %v539 = vsel %vm363, %v285, 0
        %v542 = vsel %vm363, %v286, 0
        %v545 = vsel %vm363, %v287, 0
        %v548 = vsel %vm363, %v288, 0
        %v551 = vsel %vm363, %v289, 0
        %v554 = vsel %vm363, %v290, 0
        %v557 = vsel %vm363, %v291, 0
        %v560 = vsel %vm363, %v292, 0
        %v563 = vsel %vm363, %v293, 0
        %v566 = vsel %vm363, %v294, 0
        %v569 = vsel %vm363, %v295, 0
        %v572 = vsel %vm363, %v296, 0
        %v575 = vsel %vm363, %v297, 0
        %v578 = vsel %vm363, %v298, 0
        %v581 = vsel %vm363, %v299, 0
        %v584 = vsel %vm363, %v300, 0
        %v587 = vsel %vm363, %v301, 0
        %v590 = vsel %vm363, %v302, 0
        %v593 = vsel %vm363, %v303, 0
        %v596 = vsel %vm363, %v304, 0
        %v599 = vsel %vm363, %v305, 0
        %v602 = vsel %vm363, %v306, 0
        %v605 = vsel %vm363, %v307, 0
        %v608 = vsel %vm363, %v308, 0
        %v611 = vsel %vm363, %v309, 0
        %v614 = vsel %vm363, %v310, 0
        %v617 = vsel %vm363, %v311, 0
        %v620 = vsel %vm363, %v312, 0
        %v623 = vsel %vm363, %v313, 0
        %v626 = vsel %vm363, %v314, 0
        %v629 = vsel %vm363, %v315, 0
        %v632 = vsel %vm363, %v316, 0
        %v635 = vsel %vm363, %v317, 0
        %v638 = vsel %vm363, %v318, 0
        %v641 = vsel %vm363, %v319, 0
        %v644 = vsel %vm363, %v320, 0
        %v647 = vsel %vm363, %v321, 0
        %v650 = vsel %vm363, %v322, 0
        %v653 = vsel %vm363, %v323, 0
        %v656 = vsel %vm363, %v324, 0
        %v659 = vsel %vm363, %v325, 0
        %v662 = vsel %vm363, %v326, 0
        %v665 = vsel %vm363, %v327, 0
        %v668 = vsel %vm363, %v328, 0
        %v671 = vsel %vm363, %v329, 0
        %v674 = vsel %vm363, %v330, 0
        %v677 = vsel %vm363, %v331, 0
        %v680 = vsel %vm363, %v332, 0
        %v683 = vsel %vm363, %v333, 0
        %v686 = vsel %vm363, %v334, 0
        %v689 = vsel %vm363, %v335, 0
        %v692 = vsel %vm363, %v336, 0
        %v695 = vsel %vm363, %v337, 0
        %v698 = vsel %vm363, %v338, 0
        %v701 = vsel %vm363, %v339, 0
        %v704 = vsel %vm363, %v340, 0
        %v707 = vsel %vm363, %v341, 0
        %v710 = vsel %vm363, %v342, 0
        %v713 = vsel %vm363, %v343, 0
        %v716 = vsel %vm363, %v344, 0
        %v719 = vsel %vm363, %v345, 0
        %v722 = vsel %vm363, %v346, 0
        %v725 = vsel %vm363, %v347, 0
        %v728 = vsel %vm363, %v348, 0
        %v731 = vsel %vm363, %v349, 0
        %v734 = vsel %vm363, %v350, 0
        %v737 = vsel %vm363, %v351, 0
        %v740 = vsel %vm363, %v352, 0
        %v743 = vsel %vm363, %v353, 0
        %v746 = vsel %vm363, %v354, 0
        %v749 = vsel %vm363, %v355, 0
        %v752 = vsel %vm363, %v356, 0
        %v755 = vsel %vm363, %v357, 0
        %v758 = vsel %vm363, %v358, 0
        %v761 = vsel %vm363, %v359, 0
        %v764 = vsel %vm363, %v360, 0
        %v767 = vsel %vm363, %v361, 0
        %v770 = vsel %vm363, %v362, 0
        %772 = vmatpush.xpose.msra.mxu0 %v434
        %773 = vmatpush.xpose.msra.mxu0 %v431
        %774 = vmatpush.xpose.msra.mxu0 %v428
        %775 = vmatpush.xpose.msra.mxu0 %v425
        %776 = vmatpush.xpose.msra.mxu0 %v422
        %777 = vmatpush.xpose.msra.mxu0 %v419
        %778 = vmatpush.xpose.msra.mxu0 %v416
        %779 = vmatpush.xpose.msra.mxu0 %v413
        %780 = vmatpush.xpose.msra.mxu0 %v410
        %781 = vmatpush.xpose.msra.mxu0 %v407
        %782 = vmatpush.xpose.msra.mxu0 %v404
        %783 = vmatpush.xpose.msra.mxu0 %v401
        %784 = vmatpush.xpose.msra.mxu0 %v398
        %785 = vmatpush.xpose.msra.mxu0 %v395
        %786 = vmatpush.xpose.msra.mxu0 %v392
        %787 = vmatpush.xpose.msra.mxu0 %v389
        %788 = vmatmul.f32.gmra.mxu0 %v365
        %v789 = vpop.f32.mrf.mxu0
        %v790 = vadd.f32 0.0, %v789
        %791 = vmatmul.f32.gmra.mxu0 %v368
        %v792 = vpop.f32.mrf.mxu0
        %v793 = vadd.f32 0.0, %v792
        %794 = vmatmul.f32.gmra.mxu0 %v371
        %v795 = vpop.f32.mrf.mxu0
        %v796 = vadd.f32 0.0, %v795
        %797 = vmatmul.f32.gmra.mxu0 %v374
        %v798 = vpop.f32.mrf.mxu0
        %v799 = vadd.f32 0.0, %v798
        %800 = vmatmul.f32.gmra.mxu0 %v377
        %v801 = vpop.f32.mrf.mxu0
        %v802 = vadd.f32 0.0, %v801
        %803 = vmatmul.f32.gmra.mxu0 %v380
        %v804 = vpop.f32.mrf.mxu0
        %v805 = vadd.f32 0.0, %v804
        %806 = vmatmul.f32.gmra.mxu0 %v383
        %v807 = vpop.f32.mrf.mxu0
        %v808 = vadd.f32 0.0, %v807
        %809 = vmatmul.f32.gmra.mxu0 %v386
        %v810 = vpop.f32.mrf.mxu0
        %v811 = vadd.f32 0.0, %v810
        %812 = vdwg.mxu0
        %813 = vmatpush.xpose.msra.mxu0 %v482
        %814 = vmatpush.xpose.msra.mxu0 %v479
        %815 = vmatpush.xpose.msra.mxu0 %v476
        %816 = vmatpush.xpose.msra.mxu0 %v473
        %817 = vmatpush.xpose.msra.mxu0 %v470
        %818 = vmatpush.xpose.msra.mxu0 %v467
        %819 = vmatpush.xpose.msra.mxu0 %v464
        %820 = vmatpush.xpose.msra.mxu0 %v461
        %821 = vmatpush.xpose.msra.mxu0 %v458
        %822 = vmatpush.xpose.msra.mxu0 %v455
        %823 = vmatpush.xpose.msra.mxu0 %v452
        %824 = vmatpush.xpose.msra.mxu0 %v449
        %825 = vmatpush.xpose.msra.mxu0 %v446
        %826 = vmatpush.xpose.msra.mxu0 %v443
        %827 = vmatpush.xpose.msra.mxu0 %v440
        %828 = vmatpush.xpose.msra.mxu0 %v437
        %829 = vmatmul.f32.gmra.mxu0 %v365
        %v830 = vpop.f32.mrf.mxu0
        %v831 = vadd.f32 0.0, %v830
        %832 = vmatmul.f32.gmra.mxu0 %v368
        %v833 = vpop.f32.mrf.mxu0
        %v834 = vadd.f32 0.0, %v833
        %835 = vmatmul.f32.gmra.mxu0 %v371
        %v836 = vpop.f32.mrf.mxu0
        %v837 = vadd.f32 0.0, %v836
        %838 = vmatmul.f32.gmra.mxu0 %v374
        %v839 = vpop.f32.mrf.mxu0
        %v840 = vadd.f32 0.0, %v839
        %841 = vmatmul.f32.gmra.mxu0 %v377
        %v842 = vpop.f32.mrf.mxu0
        %v843 = vadd.f32 0.0, %v842
        %844 = vmatmul.f32.gmra.mxu0 %v380
        %v845 = vpop.f32.mrf.mxu0
        %v846 = vadd.f32 0.0, %v845
        %847 = vmatmul.f32.gmra.mxu0 %v383
        %v848 = vpop.f32.mrf.mxu0
        %v849 = vadd.f32 0.0, %v848
        %850 = vmatmul.f32.gmra.mxu0 %v386
        %v851 = vpop.f32.mrf.mxu0
        %v852 = vadd.f32 0.0, %v851
        %853 = vdwg.mxu0
        %854 = vmatpush.xpose.msra.mxu0 %v530
        %855 = vmatpush.xpose.msra.mxu0 %v527
        %856 = vmatpush.xpose.msra.mxu0 %v524
        %857 = vmatpush.xpose.msra.mxu0 %v521
        %858 = vmatpush.xpose.msra.mxu0 %v518
        %859 = vmatpush.xpose.msra.mxu0 %v515
        %860 = vmatpush.xpose.msra.mxu0 %v512
        %861 = vmatpush.xpose.msra.mxu0 %v509
        %862 = vmatpush.xpose.msra.mxu0 %v506
        %863 = vmatpush.xpose.msra.mxu0 %v503
        %864 = vmatpush.xpose.msra.mxu0 %v500
        %865 = vmatpush.xpose.msra.mxu0 %v497
        %866 = vmatpush.xpose.msra.mxu0 %v494
        %867 = vmatpush.xpose.msra.mxu0 %v491
        %868 = vmatpush.xpose.msra.mxu0 %v488
        %869 = vmatpush.xpose.msra.mxu0 %v485
        %870 = vmatmul.f32.gmra.mxu0 %v365
        %v871 = vpop.f32.mrf.mxu0
        %v872 = vadd.f32 0.0, %v871
        %873 = vmatmul.f32.gmra.mxu0 %v368
        %v874 = vpop.f32.mrf.mxu0
        %v875 = vadd.f32 0.0, %v874
        %876 = vmatmul.f32.gmra.mxu0 %v371
        %v877 = vpop.f32.mrf.mxu0
        %v878 = vadd.f32 0.0, %v877
        %879 = vmatmul.f32.gmra.mxu0 %v374
        %v880 = vpop.f32.mrf.mxu0
        %v881 = vadd.f32 0.0, %v880
        %882 = vmatmul.f32.gmra.mxu0 %v377
        %v883 = vpop.f32.mrf.mxu0
        %v884 = vadd.f32 0.0, %v883
        %885 = vmatmul.f32.gmra.mxu0 %v380
        %v886 = vpop.f32.mrf.mxu0
        %v887 = vadd.f32 0.0, %v886
        %888 = vmatmul.f32.gmra.mxu0 %v383
        %v889 = vpop.f32.mrf.mxu0
        %v890 = vadd.f32 0.0, %v889
        %891 = vmatmul.f32.gmra.mxu0 %v386
        %v892 = vpop.f32.mrf.mxu0
        %v893 = vadd.f32 0.0, %v892
        %894 = vdwg.mxu0
        %895 = vmatpush.xpose.msra.mxu0 %v578
        %896 = vmatpush.xpose.msra.mxu0 %v575
        %897 = vmatpush.xpose.msra.mxu0 %v572
        %898 = vmatpush.xpose.msra.mxu0 %v569
        %899 = vmatpush.xpose.msra.mxu0 %v566
        %900 = vmatpush.xpose.msra.mxu0 %v563
        %901 = vmatpush.xpose.msra.mxu0 %v560
        %902 = vmatpush.xpose.msra.mxu0 %v557
        %903 = vmatpush.xpose.msra.mxu0 %v554
        %904 = vmatpush.xpose.msra.mxu0 %v551
        %905 = vmatpush.xpose.msra.mxu0 %v548
        %906 = vmatpush.xpose.msra.mxu0 %v545
        %907 = vmatpush.xpose.msra.mxu0 %v542
        %908 = vmatpush.xpose.msra.mxu0 %v539
        %909 = vmatpush.xpose.msra.mxu0 %v536
        %910 = vmatpush.xpose.msra.mxu0 %v533
        %911 = vmatmul.f32.gmra.mxu0 %v365
        %v912 = vpop.f32.mrf.mxu0
        %v913 = vadd.f32 0.0, %v912
        %914 = vmatmul.f32.gmra.mxu0 %v368
        %v915 = vpop.f32.mrf.mxu0
        %v916 = vadd.f32 0.0, %v915
        %917 = vmatmul.f32.gmra.mxu0 %v371
        %v918 = vpop.f32.mrf.mxu0
        %v919 = vadd.f32 0.0, %v918
        %920 = vmatmul.f32.gmra.mxu0 %v374
        %v921 = vpop.f32.mrf.mxu0
        %v922 = vadd.f32 0.0, %v921
        %923 = vmatmul.f32.gmra.mxu0 %v377
        %v924 = vpop.f32.mrf.mxu0
        %v925 = vadd.f32 0.0, %v924
        %926 = vmatmul.f32.gmra.mxu0 %v380
        %v927 = vpop.f32.mrf.mxu0
        %v928 = vadd.f32 0.0, %v927
        %929 = vmatmul.f32.gmra.mxu0 %v383
        %v930 = vpop.f32.mrf.mxu0
        %v931 = vadd.f32 0.0, %v930
        %932 = vmatmul.f32.gmra.mxu0 %v386
        %v933 = vpop.f32.mrf.mxu0
        %v934 = vadd.f32 0.0, %v933
        %935 = vdwg.mxu0
        %936 = vmatpush.xpose.msra.mxu0 %v626
        %937 = vmatpush.xpose.msra.mxu0 %v623
        %938 = vmatpush.xpose.msra.mxu0 %v620
        %939 = vmatpush.xpose.msra.mxu0 %v617
        %940 = vmatpush.xpose.msra.mxu0 %v614
        %941 = vmatpush.xpose.msra.mxu0 %v611
        %942 = vmatpush.xpose.msra.mxu0 %v608
        %943 = vmatpush.xpose.msra.mxu0 %v605
        %944 = vmatpush.xpose.msra.mxu0 %v602
        %945 = vmatpush.xpose.msra.mxu0 %v599
        %946 = vmatpush.xpose.msra.mxu0 %v596
        %947 = vmatpush.xpose.msra.mxu0 %v593
        %948 = vmatpush.xpose.msra.mxu0 %v590
        %949 = vmatpush.xpose.msra.mxu0 %v587
        %950 = vmatpush.xpose.msra.mxu0 %v584
        %951 = vmatpush.xpose.msra.mxu0 %v581
        %952 = vmatmul.f32.gmra.mxu0 %v365
        %v953 = vpop.f32.mrf.mxu0
        %v954 = vadd.f32 0.0, %v953
        %955 = vmatmul.f32.gmra.mxu0 %v368
        %v956 = vpop.f32.mrf.mxu0
        %v957 = vadd.f32 0.0, %v956
        %958 = vmatmul.f32.gmra.mxu0 %v371
        %v959 = vpop.f32.mrf.mxu0
        %v960 = vadd.f32 0.0, %v959
        %961 = vmatmul.f32.gmra.mxu0 %v374
        %v962 = vpop.f32.mrf.mxu0
        %v963 = vadd.f32 0.0, %v962
        %964 = vmatmul.f32.gmra.mxu0 %v377
        %v965 = vpop.f32.mrf.mxu0
        %v966 = vadd.f32 0.0, %v965
        %967 = vmatmul.f32.gmra.mxu0 %v380
        %v968 = vpop.f32.mrf.mxu0
        %v969 = vadd.f32 0.0, %v968
        %970 = vmatmul.f32.gmra.mxu0 %v383
        %v971 = vpop.f32.mrf.mxu0
        %v972 = vadd.f32 0.0, %v971
        %973 = vmatmul.f32.gmra.mxu0 %v386
        %v974 = vpop.f32.mrf.mxu0
        %v975 = vadd.f32 0.0, %v974
        %976 = vdwg.mxu0
        %977 = vmatpush.xpose.msra.mxu0 %v674
        %978 = vmatpush.xpose.msra.mxu0 %v671
        %979 = vmatpush.xpose.msra.mxu0 %v668
        %980 = vmatpush.xpose.msra.mxu0 %v665
        %981 = vmatpush.xpose.msra.mxu0 %v662
        %982 = vmatpush.xpose.msra.mxu0 %v659
        %983 = vmatpush.xpose.msra.mxu0 %v656
        %984 = vmatpush.xpose.msra.mxu0 %v653
        %985 = vmatpush.xpose.msra.mxu0 %v650
        %986 = vmatpush.xpose.msra.mxu0 %v647
        %987 = vmatpush.xpose.msra.mxu0 %v644
        %988 = vmatpush.xpose.msra.mxu0 %v641
        %989 = vmatpush.xpose.msra.mxu0 %v638
        %990 = vmatpush.xpose.msra.mxu0 %v635
        %991 = vmatpush.xpose.msra.mxu0 %v632
        %992 = vmatpush.xpose.msra.mxu0 %v629
        %993 = vmatmul.f32.gmra.mxu0 %v365
        %v994 = vpop.f32.mrf.mxu0
        %v995 = vadd.f32 0.0, %v994
        %996 = vmatmul.f32.gmra.mxu0 %v368
        %v997 = vpop.f32.mrf.mxu0
        %v998 = vadd.f32 0.0, %v997
        %999 = vmatmul.f32.gmra.mxu0 %v371
        %v1000 = vpop.f32.mrf.mxu0
        %v1001 = vadd.f32 0.0, %v1000
        %1002 = vmatmul.f32.gmra.mxu0 %v374
        %v1003 = vpop.f32.mrf.mxu0
        %v1004 = vadd.f32 0.0, %v1003
        %1005 = vmatmul.f32.gmra.mxu0 %v377
        %v1006 = vpop.f32.mrf.mxu0
        %v1007 = vadd.f32 0.0, %v1006
        %1008 = vmatmul.f32.gmra.mxu0 %v380
        %v1009 = vpop.f32.mrf.mxu0
        %v1010 = vadd.f32 0.0, %v1009
        %1011 = vmatmul.f32.gmra.mxu0 %v383
        %v1012 = vpop.f32.mrf.mxu0
        %v1013 = vadd.f32 0.0, %v1012
        %1014 = vmatmul.f32.gmra.mxu0 %v386
        %v1015 = vpop.f32.mrf.mxu0
        %v1016 = vadd.f32 0.0, %v1015
        %1017 = vdwg.mxu0
        %1018 = vmatpush.xpose.msra.mxu0 %v722
        %1019 = vmatpush.xpose.msra.mxu0 %v719
        %1020 = vmatpush.xpose.msra.mxu0 %v716
        %1021 = vmatpush.xpose.msra.mxu0 %v713
        %1022 = vmatpush.xpose.msra.mxu0 %v710
        %1023 = vmatpush.xpose.msra.mxu0 %v707
        %1024 = vmatpush.xpose.msra.mxu0 %v704
        %1025 = vmatpush.xpose.msra.mxu0 %v701
        %1026 = vmatpush.xpose.msra.mxu0 %v698
        %1027 = vmatpush.xpose.msra.mxu0 %v695
        %1028 = vmatpush.xpose.msra.mxu0 %v692
        %1029 = vmatpush.xpose.msra.mxu0 %v689
        %1030 = vmatpush.xpose.msra.mxu0 %v686
        %1031 = vmatpush.xpose.msra.mxu0 %v683
        %1032 = vmatpush.xpose.msra.mxu0 %v680
        %1033 = vmatpush.xpose.msra.mxu0 %v677
        %1034 = vmatmul.f32.gmra.mxu0 %v365
        %v1035 = vpop.f32.mrf.mxu0
        %v1036 = vadd.f32 0.0, %v1035
        %1037 = vmatmul.f32.gmra.mxu0 %v368
        %v1038 = vpop.f32.mrf.mxu0
        %v1039 = vadd.f32 0.0, %v1038
        %1040 = vmatmul.f32.gmra.mxu0 %v371
        %v1041 = vpop.f32.mrf.mxu0
        %v1042 = vadd.f32 0.0, %v1041
        %1043 = vmatmul.f32.gmra.mxu0 %v374
        %v1044 = vpop.f32.mrf.mxu0
        %v1045 = vadd.f32 0.0, %v1044
        %1046 = vmatmul.f32.gmra.mxu0 %v377
        %v1047 = vpop.f32.mrf.mxu0
        %v1048 = vadd.f32 0.0, %v1047
        %1049 = vmatmul.f32.gmra.mxu0 %v380
        %v1050 = vpop.f32.mrf.mxu0
        %v1051 = vadd.f32 0.0, %v1050
        %1052 = vmatmul.f32.gmra.mxu0 %v383
        %v1053 = vpop.f32.mrf.mxu0
        %v1054 = vadd.f32 0.0, %v1053
        %1055 = vmatmul.f32.gmra.mxu0 %v386
        %v1056 = vpop.f32.mrf.mxu0
        %v1057 = vadd.f32 0.0, %v1056
        %1058 = vdwg.mxu0
        %1059 = vmatpush.xpose.msra.mxu0 %v770
        %1060 = vmatpush.xpose.msra.mxu0 %v767
        %1061 = vmatpush.xpose.msra.mxu0 %v764
        %1062 = vmatpush.xpose.msra.mxu0 %v761
        %1063 = vmatpush.xpose.msra.mxu0 %v758
        %1064 = vmatpush.xpose.msra.mxu0 %v755
        %1065 = vmatpush.xpose.msra.mxu0 %v752
        %1066 = vmatpush.xpose.msra.mxu0 %v749
        %1067 = vmatpush.xpose.msra.mxu0 %v746
        %1068 = vmatpush.xpose.msra.mxu0 %v743
        %1069 = vmatpush.xpose.msra.mxu0 %v740
        %1070 = vmatpush.xpose.msra.mxu0 %v737
        %1071 = vmatpush.xpose.msra.mxu0 %v734
        %1072 = vmatpush.xpose.msra.mxu0 %v731
        %1073 = vmatpush.xpose.msra.mxu0 %v728
        %1074 = vmatpush.xpose.msra.mxu0 %v725
        %1075 = vmatmul.f32.gmra.mxu0 %v365
        %v1076 = vpop.f32.mrf.mxu0
        %v1077 = vadd.f32 0.0, %v1076
        %1078 = vmatmul.f32.gmra.mxu0 %v368
        %v1079 = vpop.f32.mrf.mxu0
        %v1080 = vadd.f32 0.0, %v1079
        %1081 = vmatmul.f32.gmra.mxu0 %v371
        %v1082 = vpop.f32.mrf.mxu0
        %v1083 = vadd.f32 0.0, %v1082
        %1084 = vmatmul.f32.gmra.mxu0 %v374
        %v1085 = vpop.f32.mrf.mxu0
        %v1086 = vadd.f32 0.0, %v1085
        %1087 = vmatmul.f32.gmra.mxu0 %v377
        %v1088 = vpop.f32.mrf.mxu0
        %v1089 = vadd.f32 0.0, %v1088
        %1090 = vmatmul.f32.gmra.mxu0 %v380
        %v1091 = vpop.f32.mrf.mxu0
        %v1092 = vadd.f32 0.0, %v1091
        %1093 = vmatmul.f32.gmra.mxu0 %v383
        %v1094 = vpop.f32.mrf.mxu0
        %v1095 = vadd.f32 0.0, %v1094
        %1096 = vmatmul.f32.gmra.mxu0 %v386
        %v1097 = vpop.f32.mrf.mxu0
        %v1098 = vadd.f32 0.0, %v1097
        %1099 = vdwg.mxu0
        %v1100 = vld [vmem:[%s2] sm:$0xff]
        %v1101 = vld [vmem:[%s2 + $0x8] sm:$0xff]
        %v1102 = vld [vmem:[%s2 + $0x10] sm:$0xff]
        %v1103 = vld [vmem:[%s2 + $0x18] sm:$0xff]
        %v1104 = vld [vmem:[%s2 + $0x20] sm:$0xff]
        %v1105 = vld [vmem:[%s2 + $0x28] sm:$0xff]
        %v1106 = vld [vmem:[%s2 + $0x30] sm:$0xff]
        %v1107 = vld [vmem:[%s2 + $0x38] sm:$0xff]
        %1109 = vset.pattern.permute.xlu0 0
        %1110 = vperm.xlu0 %1109, %v1100
        %v1111 = vpop.permute.xlu0 %1110
        %1114 = vset.pattern.permute.xlu0 0
        %1115 = vperm.xlu0 %1114, %v1101
        %v1116 = vpop.permute.xlu0 %1115
        %1119 = vset.pattern.permute.xlu0 0
        %1120 = vperm.xlu0 %1119, %v1102
        %v1121 = vpop.permute.xlu0 %1120
        %1124 = vset.pattern.permute.xlu0 0
        %1125 = vperm.xlu0 %1124, %v1103
        %v1126 = vpop.permute.xlu0 %1125
        %1129 = vset.pattern.permute.xlu0 0
        %1130 = vperm.xlu0 %1129, %v1104
        %v1131 = vpop.permute.xlu0 %1130
        %1134 = vset.pattern.permute.xlu0 0
        %1135 = vperm.xlu0 %1134, %v1105
        %v1136 = vpop.permute.xlu0 %1135
        %1139 = vset.pattern.permute.xlu0 0
        %1140 = vperm.xlu0 %1139, %v1106
        %v1141 = vpop.permute.xlu0 %1140
        %1144 = vset.pattern.permute.xlu0 0
        %1145 = vperm.xlu0 %1144, %v1107
        %v1146 = vpop.permute.xlu0 %1145
        %vm1148 = vcmp.le.f32.partialorder %v790, %v1111
        %vm1149 = vcmp.le.f32.partialorder %v831, %v1111
        %vm1150 = vcmp.le.f32.partialorder %v872, %v1111
        %vm1151 = vcmp.le.f32.partialorder %v913, %v1111
        %vm1152 = vcmp.le.f32.partialorder %v954, %v1111
        %vm1153 = vcmp.le.f32.partialorder %v995, %v1111
        %vm1154 = vcmp.le.f32.partialorder %v1036, %v1111
        %vm1155 = vcmp.le.f32.partialorder %v1077, %v1111
        %vm1156 = vcmp.le.f32.partialorder %v793, %v1116
        %vm1157 = vcmp.le.f32.partialorder %v834, %v1116
        %vm1158 = vcmp.le.f32.partialorder %v875, %v1116
        %vm1159 = vcmp.le.f32.partialorder %v916, %v1116
        %vm1160 = vcmp.le.f32.partialorder %v957, %v1116
        %vm1161 = vcmp.le.f32.partialorder %v998, %v1116
        %vm1162 = vcmp.le.f32.partialorder %v1039, %v1116
        %vm1163 = vcmp.le.f32.partialorder %v1080, %v1116
        %vm1164 = vcmp.le.f32.partialorder %v796, %v1121
        %vm1165 = vcmp.le.f32.partialorder %v837, %v1121
        %vm1166 = vcmp.le.f32.partialorder %v878, %v1121
        %vm1167 = vcmp.le.f32.partialorder %v919, %v1121
        %vm1168 = vcmp.le.f32.partialorder %v960, %v1121
        %vm1169 = vcmp.le.f32.partialorder %v1001, %v1121
        %vm1170 = vcmp.le.f32.partialorder %v1042, %v1121
        %vm1171 = vcmp.le.f32.partialorder %v1083, %v1121
        %vm1172 = vcmp.le.f32.partialorder %v799, %v1126
        %vm1173 = vcmp.le.f32.partialorder %v840, %v1126
        %vm1174 = vcmp.le.f32.partialorder %v881, %v1126
        %vm1175 = vcmp.le.f32.partialorder %v922, %v1126
        %vm1176 = vcmp.le.f32.partialorder %v963, %v1126
        %vm1177 = vcmp.le.f32.partialorder %v1004, %v1126
        %vm1178 = vcmp.le.f32.partialorder %v1045, %v1126
        %vm1179 = vcmp.le.f32.partialorder %v1086, %v1126
        %vm1180 = vcmp.le.f32.partialorder %v802, %v1131
        %vm1181 = vcmp.le.f32.partialorder %v843, %v1131
        %vm1182 = vcmp.le.f32.partialorder %v884, %v1131
        %vm1183 = vcmp.le.f32.partialorder %v925, %v1131
        %vm1184 = vcmp.le.f32.partialorder %v966, %v1131
        %vm1185 = vcmp.le.f32.partialorder %v1007, %v1131
        %vm1186 = vcmp.le.f32.partialorder %v1048, %v1131
        %vm1187 = vcmp.le.f32.partialorder %v1089, %v1131
        %vm1188 = vcmp.le.f32.partialorder %v805, %v1136
        %vm1189 = vcmp.le.f32.partialorder %v846, %v1136
        %vm1190 = vcmp.le.f32.partialorder %v887, %v1136
        %vm1191 = vcmp.le.f32.partialorder %v928, %v1136
        %vm1192 = vcmp.le.f32.partialorder %v969, %v1136
        %vm1193 = vcmp.le.f32.partialorder %v1010, %v1136
        %vm1194 = vcmp.le.f32.partialorder %v1051, %v1136
        %vm1195 = vcmp.le.f32.partialorder %v1092, %v1136
        %vm1196 = vcmp.le.f32.partialorder %v808, %v1141
        %vm1197 = vcmp.le.f32.partialorder %v849, %v1141
        %vm1198 = vcmp.le.f32.partialorder %v890, %v1141
        %vm1199 = vcmp.le.f32.partialorder %v931, %v1141
        %vm1200 = vcmp.le.f32.partialorder %v972, %v1141
        %vm1201 = vcmp.le.f32.partialorder %v1013, %v1141
        %vm1202 = vcmp.le.f32.partialorder %v1054, %v1141
        %vm1203 = vcmp.le.f32.partialorder %v1095, %v1141
        %vm1204 = vcmp.le.f32.partialorder %v811, %v1146
        %vm1205 = vcmp.le.f32.partialorder %v852, %v1146
        %vm1206 = vcmp.le.f32.partialorder %v893, %v1146
        %vm1207 = vcmp.le.f32.partialorder %v934, %v1146
        %vm1208 = vcmp.le.f32.partialorder %v975, %v1146
        %vm1209 = vcmp.le.f32.partialorder %v1016, %v1146
        %vm1210 = vcmp.le.f32.partialorder %v1057, %v1146
        %vm1211 = vcmp.le.f32.partialorder %v1098, %v1146
        %v1212 = vsel %vm1148, 1.0, -1.0
        %v1213 = vsel %vm1149, 1.0, -1.0
        %v1214 = vsel %vm1150, 1.0, -1.0
        %v1215 = vsel %vm1151, 1.0, -1.0
        %v1216 = vsel %vm1152, 1.0, -1.0
        %v1217 = vsel %vm1153, 1.0, -1.0
        %v1218 = vsel %vm1154, 1.0, -1.0
        %v1219 = vsel %vm1155, 1.0, -1.0
        %v1220 = vsel %vm1156, 1.0, -1.0
        %v1221 = vsel %vm1157, 1.0, -1.0
        %v1222 = vsel %vm1158, 1.0, -1.0
        %v1223 = vsel %vm1159, 1.0, -1.0
        %v1224 = vsel %vm1160, 1.0, -1.0
        %v1225 = vsel %vm1161, 1.0, -1.0
        %v1226 = vsel %vm1162, 1.0, -1.0
        %v1227 = vsel %vm1163, 1.0, -1.0
        %v1228 = vsel %vm1164, 1.0, -1.0
        %v1229 = vsel %vm1165, 1.0, -1.0
        %v1230 = vsel %vm1166, 1.0, -1.0
        %v1231 = vsel %vm1167, 1.0, -1.0
        %v1232 = vsel %vm1168, 1.0, -1.0
        %v1233 = vsel %vm1169, 1.0, -1.0
        %v1234 = vsel %vm1170, 1.0, -1.0
        %v1235 = vsel %vm1171, 1.0, -1.0
        %v1236 = vsel %vm1172, 1.0, -1.0
        %v1237 = vsel %vm1173, 1.0, -1.0
        %v1238 = vsel %vm1174, 1.0, -1.0
        %v1239 = vsel %vm1175, 1.0, -1.0
        %v1240 = vsel %vm1176, 1.0, -1.0
        %v1241 = vsel %vm1177, 1.0, -1.0
        %v1242 = vsel %vm1178, 1.0, -1.0
        %v1243 = vsel %vm1179, 1.0, -1.0
        %v1244 = vsel %vm1180, 1.0, -1.0
        %v1245 = vsel %vm1181, 1.0, -1.0
        %v1246 = vsel %vm1182, 1.0, -1.0
        %v1247 = vsel %vm1183, 1.0, -1.0
        %v1248 = vsel %vm1184, 1.0, -1.0
        %v1249 = vsel %vm1185, 1.0, -1.0
        %v1250 = vsel %vm1186, 1.0, -1.0
        %v1251 = vsel %vm1187, 1.0, -1.0
        %v1252 = vsel %vm1188, 1.0, -1.0
        %v1253 = vsel %vm1189, 1.0, -1.0
        %v1254 = vsel %vm1190, 1.0, -1.0
        %v1255 = vsel %vm1191, 1.0, -1.0
        %v1256 = vsel %vm1192, 1.0, -1.0
        %v1257 = vsel %vm1193, 1.0, -1.0
        %v1258 = vsel %vm1194, 1.0, -1.0
        %v1259 = vsel %vm1195, 1.0, -1.0
        %v1260 = vsel %vm1196, 1.0, -1.0
        %v1261 = vsel %vm1197, 1.0, -1.0
        %v1262 = vsel %vm1198, 1.0, -1.0
        %v1263 = vsel %vm1199, 1.0, -1.0
        %v1264 = vsel %vm1200, 1.0, -1.0
        %v1265 = vsel %vm1201, 1.0, -1.0
        %v1266 = vsel %vm1202, 1.0, -1.0
        %v1267 = vsel %vm1203, 1.0, -1.0
        %v1268 = vsel %vm1204, 1.0, -1.0
        %v1269 = vsel %vm1205, 1.0, -1.0
        %v1270 = vsel %vm1206, 1.0, -1.0
        %v1271 = vsel %vm1207, 1.0, -1.0
        %v1272 = vsel %vm1208, 1.0, -1.0
        %v1273 = vsel %vm1209, 1.0, -1.0
        %v1274 = vsel %vm1210, 1.0, -1.0
        %v1275 = vsel %vm1211, 1.0, -1.0
        %v1276 = vpack.c.bf16 %v1220, %v1212
        %v1277 = vpack.c.bf16 %v1221, %v1213
        %v1278 = vpack.c.bf16 %v1222, %v1214
        %v1279 = vpack.c.bf16 %v1223, %v1215
        %v1280 = vpack.c.bf16 %v1224, %v1216
        %v1281 = vpack.c.bf16 %v1225, %v1217
        %v1282 = vpack.c.bf16 %v1226, %v1218
        %v1283 = vpack.c.bf16 %v1227, %v1219
        %v1284 = vpack.c.bf16 %v1236, %v1228
        %v1285 = vpack.c.bf16 %v1237, %v1229
        %v1286 = vpack.c.bf16 %v1238, %v1230
        %v1287 = vpack.c.bf16 %v1239, %v1231
        %v1288 = vpack.c.bf16 %v1240, %v1232
        %v1289 = vpack.c.bf16 %v1241, %v1233
        %v1290 = vpack.c.bf16 %v1242, %v1234
        %v1291 = vpack.c.bf16 %v1243, %v1235
        %v1292 = vpack.c.bf16 %v1252, %v1244
        %v1293 = vpack.c.bf16 %v1253, %v1245
        %v1294 = vpack.c.bf16 %v1254, %v1246
        %v1295 = vpack.c.bf16 %v1255, %v1247
        %v1296 = vpack.c.bf16 %v1256, %v1248
        %v1297 = vpack.c.bf16 %v1257, %v1249
        %v1298 = vpack.c.bf16 %v1258, %v1250
        %v1299 = vpack.c.bf16 %v1259, %v1251
        %v1300 = vpack.c.bf16 %v1268, %v1260
        %v1301 = vpack.c.bf16 %v1269, %v1261
        %v1302 = vpack.c.bf16 %v1270, %v1262
        %v1303 = vpack.c.bf16 %v1271, %v1263
        %v1304 = vpack.c.bf16 %v1272, %v1264
        %v1305 = vpack.c.bf16 %v1273, %v1265
        %v1306 = vpack.c.bf16 %v1274, %v1266
        %v1307 = vpack.c.bf16 %v1275, %v1267
        %v1308 = vld [vmem:[%s3] sm:$0xf]
        %v1309 = vld [vmem:[%s3 + $0x4] sm:$0xf]
        %v1310 = vld [vmem:[%s3 + $0x8] sm:$0xf]
        %v1311 = vld [vmem:[%s3 + $0xc] sm:$0xf]
        %v1312 = vld [vmem:[%s3 + $0x10] sm:$0xf]
        %v1313 = vld [vmem:[%s3 + $0x14] sm:$0xf]
        %v1314 = vld [vmem:[%s3 + $0x18] sm:$0xf]
        %v1315 = vld [vmem:[%s3 + $0x1c] sm:$0xf]
        %v1324 = vunpack.c.l.b16 %v1308
        %v1325 = vunpack.c.l.b16 %v1309
        %v1326 = vunpack.c.l.b16 %v1310
        %v1327 = vunpack.c.l.b16 %v1311
        %v1328 = vunpack.c.l.b16 %v1312
        %v1329 = vunpack.c.l.b16 %v1313
        %v1330 = vunpack.c.l.b16 %v1314
        %v1331 = vunpack.c.l.b16 %v1315
        %v1332 = vpack.c.b16 %v1325, %v1324
        %v1333 = vpack.c.b16 %v1327, %v1326
        %v1334 = vpack.c.b16 %v1329, %v1328
        %v1335 = vpack.c.b16 %v1331, %v1330
        %vm1336 = vcmask 523264
        %v1338 = vsel %vm1336, %v1332, 0
        %v1341 = vsel %vm1336, %v1333, 0
        %v1344 = vsel %vm1336, %v1334, 0
        %v1347 = vsel %vm1336, %v1335, 0
        %1349 = vmatpush.bf16.msra.mxu0 0
        %1350 = vmatpush.bf16.msra.mxu0 0
        %1351 = vmatpush.bf16.msra.mxu0 0
        %1352 = vmatpush.bf16.msra.mxu0 0
        %1353 = vmatpush.bf16.msra.mxu0 %v1300
        %1354 = vmatpush.bf16.msra.mxu0 %v1292
        %1355 = vmatpush.bf16.msra.mxu0 %v1284
        %1356 = vmatpush.bf16.msra.mxu0 %v1276
        %1357 = vmatmul.bf16.gmra.mxu0 %v1338
        %v1358 = vpop.f32.mrf.mxu0
        %v1359 = vadd.f32 0.0, %v1358
        %v1360 = vpop.f32.mrf.mxu0
        %v1361 = vadd.f32 0.0, %v1360
        %1362 = vmatmul.bf16.gmra.mxu0 %v1341
        %v1363 = vpop.f32.mrf.mxu0
        %v1364 = vadd.f32 0.0, %v1363
        %v1365 = vpop.f32.mrf.mxu0
        %v1366 = vadd.f32 0.0, %v1365
        %1367 = vmatmul.bf16.gmra.mxu0 %v1344
        %v1368 = vpop.f32.mrf.mxu0
        %v1369 = vadd.f32 0.0, %v1368
        %v1370 = vpop.f32.mrf.mxu0
        %v1371 = vadd.f32 0.0, %v1370
        %1372 = vmatmul.bf16.gmra.mxu0 %v1347
        %v1373 = vpop.f32.mrf.mxu0
        %v1374 = vadd.f32 0.0, %v1373
        %v1375 = vpop.f32.mrf.mxu0
        %v1376 = vadd.f32 0.0, %v1375
        %1377 = vdwg.mxu0
        %1378 = vmatpush.bf16.msra.mxu0 0
        %1379 = vmatpush.bf16.msra.mxu0 0
        %1380 = vmatpush.bf16.msra.mxu0 0
        %1381 = vmatpush.bf16.msra.mxu0 0
        %1382 = vmatpush.bf16.msra.mxu0 %v1301
        %1383 = vmatpush.bf16.msra.mxu0 %v1293
        %1384 = vmatpush.bf16.msra.mxu0 %v1285
        %1385 = vmatpush.bf16.msra.mxu0 %v1277
        %1386 = vmatmul.bf16.gmra.mxu0 %v1338
        %v1387 = vpop.f32.mrf.mxu0
        %v1388 = vadd.f32 0.0, %v1387
        %v1389 = vpop.f32.mrf.mxu0
        %v1390 = vadd.f32 0.0, %v1389
        %1391 = vmatmul.bf16.gmra.mxu0 %v1341
        %v1392 = vpop.f32.mrf.mxu0
        %v1393 = vadd.f32 0.0, %v1392
        %v1394 = vpop.f32.mrf.mxu0
        %v1395 = vadd.f32 0.0, %v1394
        %1396 = vmatmul.bf16.gmra.mxu0 %v1344
        %v1397 = vpop.f32.mrf.mxu0
        %v1398 = vadd.f32 0.0, %v1397
        %v1399 = vpop.f32.mrf.mxu0
        %v1400 = vadd.f32 0.0, %v1399
        %1401 = vmatmul.bf16.gmra.mxu0 %v1347
        %v1402 = vpop.f32.mrf.mxu0
        %v1403 = vadd.f32 0.0, %v1402
        %v1404 = vpop.f32.mrf.mxu0
        %v1405 = vadd.f32 0.0, %v1404
        %1406 = vdwg.mxu0
        %1407 = vmatpush.bf16.msra.mxu0 0
        %1408 = vmatpush.bf16.msra.mxu0 0
        %1409 = vmatpush.bf16.msra.mxu0 0
        %1410 = vmatpush.bf16.msra.mxu0 0
        %1411 = vmatpush.bf16.msra.mxu0 %v1302
        %1412 = vmatpush.bf16.msra.mxu0 %v1294
        %1413 = vmatpush.bf16.msra.mxu0 %v1286
        %1414 = vmatpush.bf16.msra.mxu0 %v1278
        %1415 = vmatmul.bf16.gmra.mxu0 %v1338
        %v1416 = vpop.f32.mrf.mxu0
        %v1417 = vadd.f32 0.0, %v1416
        %v1418 = vpop.f32.mrf.mxu0
        %v1419 = vadd.f32 0.0, %v1418
        %1420 = vmatmul.bf16.gmra.mxu0 %v1341
        %v1421 = vpop.f32.mrf.mxu0
        %v1422 = vadd.f32 0.0, %v1421
        %v1423 = vpop.f32.mrf.mxu0
        %v1424 = vadd.f32 0.0, %v1423
        %1425 = vmatmul.bf16.gmra.mxu0 %v1344
        %v1426 = vpop.f32.mrf.mxu0
        %v1427 = vadd.f32 0.0, %v1426
        %v1428 = vpop.f32.mrf.mxu0
        %v1429 = vadd.f32 0.0, %v1428
        %1430 = vmatmul.bf16.gmra.mxu0 %v1347
        %v1431 = vpop.f32.mrf.mxu0
        %v1432 = vadd.f32 0.0, %v1431
        %v1433 = vpop.f32.mrf.mxu0
        %v1434 = vadd.f32 0.0, %v1433
        %1435 = vdwg.mxu0
        %1436 = vmatpush.bf16.msra.mxu0 0
        %1437 = vmatpush.bf16.msra.mxu0 0
        %1438 = vmatpush.bf16.msra.mxu0 0
        %1439 = vmatpush.bf16.msra.mxu0 0
        %1440 = vmatpush.bf16.msra.mxu0 %v1303
        %1441 = vmatpush.bf16.msra.mxu0 %v1295
        %1442 = vmatpush.bf16.msra.mxu0 %v1287
        %1443 = vmatpush.bf16.msra.mxu0 %v1279
        %1444 = vmatmul.bf16.gmra.mxu0 %v1338
        %v1445 = vpop.f32.mrf.mxu0
        %v1446 = vadd.f32 0.0, %v1445
        %v1447 = vpop.f32.mrf.mxu0
        %v1448 = vadd.f32 0.0, %v1447
        %1449 = vmatmul.bf16.gmra.mxu0 %v1341
        %v1450 = vpop.f32.mrf.mxu0
        %v1451 = vadd.f32 0.0, %v1450
        %v1452 = vpop.f32.mrf.mxu0
        %v1453 = vadd.f32 0.0, %v1452
        %1454 = vmatmul.bf16.gmra.mxu0 %v1344
        %v1455 = vpop.f32.mrf.mxu0
        %v1456 = vadd.f32 0.0, %v1455
        %v1457 = vpop.f32.mrf.mxu0
        %v1458 = vadd.f32 0.0, %v1457
        %1459 = vmatmul.bf16.gmra.mxu0 %v1347
        %v1460 = vpop.f32.mrf.mxu0
        %v1461 = vadd.f32 0.0, %v1460
        %v1462 = vpop.f32.mrf.mxu0
        %v1463 = vadd.f32 0.0, %v1462
        %1464 = vdwg.mxu0
        %1465 = vmatpush.bf16.msra.mxu0 0
        %1466 = vmatpush.bf16.msra.mxu0 0
        %1467 = vmatpush.bf16.msra.mxu0 0
        %1468 = vmatpush.bf16.msra.mxu0 0
        %1469 = vmatpush.bf16.msra.mxu0 %v1304
        %1470 = vmatpush.bf16.msra.mxu0 %v1296
        %1471 = vmatpush.bf16.msra.mxu0 %v1288
        %1472 = vmatpush.bf16.msra.mxu0 %v1280
        %1473 = vmatmul.bf16.gmra.mxu0 %v1338
        %v1474 = vpop.f32.mrf.mxu0
        %v1475 = vadd.f32 0.0, %v1474
        %v1476 = vpop.f32.mrf.mxu0
        %v1477 = vadd.f32 0.0, %v1476
        %1478 = vmatmul.bf16.gmra.mxu0 %v1341
        %v1479 = vpop.f32.mrf.mxu0
        %v1480 = vadd.f32 0.0, %v1479
        %v1481 = vpop.f32.mrf.mxu0
        %v1482 = vadd.f32 0.0, %v1481
        %1483 = vmatmul.bf16.gmra.mxu0 %v1344
        %v1484 = vpop.f32.mrf.mxu0
        %v1485 = vadd.f32 0.0, %v1484
        %v1486 = vpop.f32.mrf.mxu0
        %v1487 = vadd.f32 0.0, %v1486
        %1488 = vmatmul.bf16.gmra.mxu0 %v1347
        %v1489 = vpop.f32.mrf.mxu0
        %v1490 = vadd.f32 0.0, %v1489
        %v1491 = vpop.f32.mrf.mxu0
        %v1492 = vadd.f32 0.0, %v1491
        %1493 = vdwg.mxu0
        %1494 = vmatpush.bf16.msra.mxu0 0
        %1495 = vmatpush.bf16.msra.mxu0 0
        %1496 = vmatpush.bf16.msra.mxu0 0
        %1497 = vmatpush.bf16.msra.mxu0 0
        %1498 = vmatpush.bf16.msra.mxu0 %v1305
        %1499 = vmatpush.bf16.msra.mxu0 %v1297
        %1500 = vmatpush.bf16.msra.mxu0 %v1289
        %1501 = vmatpush.bf16.msra.mxu0 %v1281
        %1502 = vmatmul.bf16.gmra.mxu0 %v1338
        %v1503 = vpop.f32.mrf.mxu0
        %v1504 = vadd.f32 0.0, %v1503
        %v1505 = vpop.f32.mrf.mxu0
        %v1506 = vadd.f32 0.0, %v1505
        %1507 = vmatmul.bf16.gmra.mxu0 %v1341
        %v1508 = vpop.f32.mrf.mxu0
        %v1509 = vadd.f32 0.0, %v1508
        %v1510 = vpop.f32.mrf.mxu0
        %v1511 = vadd.f32 0.0, %v1510
        %1512 = vmatmul.bf16.gmra.mxu0 %v1344
        %v1513 = vpop.f32.mrf.mxu0
        %v1514 = vadd.f32 0.0, %v1513
        %v1515 = vpop.f32.mrf.mxu0
        %v1516 = vadd.f32 0.0, %v1515
        %1517 = vmatmul.bf16.gmra.mxu0 %v1347
        %v1518 = vpop.f32.mrf.mxu0
        %v1519 = vadd.f32 0.0, %v1518
        %v1520 = vpop.f32.mrf.mxu0
        %v1521 = vadd.f32 0.0, %v1520
        %1522 = vdwg.mxu0
        %1523 = vmatpush.bf16.msra.mxu0 0
        %1524 = vmatpush.bf16.msra.mxu0 0
        %1525 = vmatpush.bf16.msra.mxu0 0
        %1526 = vmatpush.bf16.msra.mxu0 0
        %1527 = vmatpush.bf16.msra.mxu0 %v1306
        %1528 = vmatpush.bf16.msra.mxu0 %v1298
        %1529 = vmatpush.bf16.msra.mxu0 %v1290
        %1530 = vmatpush.bf16.msra.mxu0 %v1282
        %1531 = vmatmul.bf16.gmra.mxu0 %v1338
        %v1532 = vpop.f32.mrf.mxu0
        %v1533 = vadd.f32 0.0, %v1532
        %v1534 = vpop.f32.mrf.mxu0
        %v1535 = vadd.f32 0.0, %v1534
        %1536 = vmatmul.bf16.gmra.mxu0 %v1341
        %v1537 = vpop.f32.mrf.mxu0
        %v1538 = vadd.f32 0.0, %v1537
        %v1539 = vpop.f32.mrf.mxu0
        %v1540 = vadd.f32 0.0, %v1539
        %1541 = vmatmul.bf16.gmra.mxu0 %v1344
        %v1542 = vpop.f32.mrf.mxu0
        %v1543 = vadd.f32 0.0, %v1542
        %v1544 = vpop.f32.mrf.mxu0
        %v1545 = vadd.f32 0.0, %v1544
        %1546 = vmatmul.bf16.gmra.mxu0 %v1347
        %v1547 = vpop.f32.mrf.mxu0
        %v1548 = vadd.f32 0.0, %v1547
        %v1549 = vpop.f32.mrf.mxu0
        %v1550 = vadd.f32 0.0, %v1549
        %1551 = vdwg.mxu0
        %1552 = vmatpush.bf16.msra.mxu0 0
        %1553 = vmatpush.bf16.msra.mxu0 0
        %1554 = vmatpush.bf16.msra.mxu0 0
        %1555 = vmatpush.bf16.msra.mxu0 0
        %1556 = vmatpush.bf16.msra.mxu0 %v1307
        %1557 = vmatpush.bf16.msra.mxu0 %v1299
        %1558 = vmatpush.bf16.msra.mxu0 %v1291
        %1559 = vmatpush.bf16.msra.mxu0 %v1283
        %1560 = vmatmul.bf16.gmra.mxu0 %v1338
        %v1561 = vpop.f32.mrf.mxu0
        %v1562 = vadd.f32 0.0, %v1561
        %v1563 = vpop.f32.mrf.mxu0
        %v1564 = vadd.f32 0.0, %v1563
        %1565 = vmatmul.bf16.gmra.mxu0 %v1341
        %v1566 = vpop.f32.mrf.mxu0
        %v1567 = vadd.f32 0.0, %v1566
        %v1568 = vpop.f32.mrf.mxu0
        %v1569 = vadd.f32 0.0, %v1568
        %1570 = vmatmul.bf16.gmra.mxu0 %v1344
        %v1571 = vpop.f32.mrf.mxu0
        %v1572 = vadd.f32 0.0, %v1571
        %v1573 = vpop.f32.mrf.mxu0
        %v1574 = vadd.f32 0.0, %v1573
        %1575 = vmatmul.bf16.gmra.mxu0 %v1347
        %v1576 = vpop.f32.mrf.mxu0
        %v1577 = vadd.f32 0.0, %v1576
        %v1578 = vpop.f32.mrf.mxu0
        %v1579 = vadd.f32 0.0, %v1578
        %1580 = vdwg.mxu0
        %vm1581 = vcmp.ge.f32.partialorder %v1359, 2.5
        %vm1582 = vcmp.ge.f32.partialorder %v1388, 2.5
        %vm1583 = vcmp.ge.f32.partialorder %v1417, 2.5
        %vm1584 = vcmp.ge.f32.partialorder %v1446, 2.5
        %vm1585 = vcmp.ge.f32.partialorder %v1475, 2.5
        %vm1586 = vcmp.ge.f32.partialorder %v1504, 2.5
        %vm1587 = vcmp.ge.f32.partialorder %v1533, 2.5
        %vm1588 = vcmp.ge.f32.partialorder %v1562, 2.5
        %vm1589 = vcmp.ge.f32.partialorder %v1361, 2.5
        %vm1590 = vcmp.ge.f32.partialorder %v1390, 2.5
        %vm1591 = vcmp.ge.f32.partialorder %v1419, 2.5
        %vm1592 = vcmp.ge.f32.partialorder %v1448, 2.5
        %vm1593 = vcmp.ge.f32.partialorder %v1477, 2.5
        %vm1594 = vcmp.ge.f32.partialorder %v1506, 2.5
        %vm1595 = vcmp.ge.f32.partialorder %v1535, 2.5
        %vm1596 = vcmp.ge.f32.partialorder %v1564, 2.5
        %vm1597 = vcmp.ge.f32.partialorder %v1364, 2.5
        %vm1598 = vcmp.ge.f32.partialorder %v1393, 2.5
        %vm1599 = vcmp.ge.f32.partialorder %v1422, 2.5
        %vm1600 = vcmp.ge.f32.partialorder %v1451, 2.5
        %vm1601 = vcmp.ge.f32.partialorder %v1480, 2.5
        %vm1602 = vcmp.ge.f32.partialorder %v1509, 2.5
        %vm1603 = vcmp.ge.f32.partialorder %v1538, 2.5
        %vm1604 = vcmp.ge.f32.partialorder %v1567, 2.5
        %vm1605 = vcmp.ge.f32.partialorder %v1366, 2.5
        %vm1606 = vcmp.ge.f32.partialorder %v1395, 2.5
        %vm1607 = vcmp.ge.f32.partialorder %v1424, 2.5
        %vm1608 = vcmp.ge.f32.partialorder %v1453, 2.5
        %vm1609 = vcmp.ge.f32.partialorder %v1482, 2.5
        %vm1610 = vcmp.ge.f32.partialorder %v1511, 2.5
        %vm1611 = vcmp.ge.f32.partialorder %v1540, 2.5
        %vm1612 = vcmp.ge.f32.partialorder %v1569, 2.5
        %vm1613 = vcmp.ge.f32.partialorder %v1369, 2.5
        %vm1614 = vcmp.ge.f32.partialorder %v1398, 2.5
        %vm1615 = vcmp.ge.f32.partialorder %v1427, 2.5
        %vm1616 = vcmp.ge.f32.partialorder %v1456, 2.5
        %vm1617 = vcmp.ge.f32.partialorder %v1485, 2.5
        %vm1618 = vcmp.ge.f32.partialorder %v1514, 2.5
        %vm1619 = vcmp.ge.f32.partialorder %v1543, 2.5
        %vm1620 = vcmp.ge.f32.partialorder %v1572, 2.5
        %vm1621 = vcmp.ge.f32.partialorder %v1371, 2.5
        %vm1622 = vcmp.ge.f32.partialorder %v1400, 2.5
        %vm1623 = vcmp.ge.f32.partialorder %v1429, 2.5
        %vm1624 = vcmp.ge.f32.partialorder %v1458, 2.5
        %vm1625 = vcmp.ge.f32.partialorder %v1487, 2.5
        %vm1626 = vcmp.ge.f32.partialorder %v1516, 2.5
        %vm1627 = vcmp.ge.f32.partialorder %v1545, 2.5
        %vm1628 = vcmp.ge.f32.partialorder %v1574, 2.5
        %vm1629 = vcmp.ge.f32.partialorder %v1374, 2.5
        %vm1630 = vcmp.ge.f32.partialorder %v1403, 2.5
        %vm1631 = vcmp.ge.f32.partialorder %v1432, 2.5
        %vm1632 = vcmp.ge.f32.partialorder %v1461, 2.5
        %vm1633 = vcmp.ge.f32.partialorder %v1490, 2.5
        %vm1634 = vcmp.ge.f32.partialorder %v1519, 2.5
        %vm1635 = vcmp.ge.f32.partialorder %v1548, 2.5
        %vm1636 = vcmp.ge.f32.partialorder %v1577, 2.5
        %vm1637 = vcmp.ge.f32.partialorder %v1376, 2.5
        %vm1638 = vcmp.ge.f32.partialorder %v1405, 2.5
        %vm1639 = vcmp.ge.f32.partialorder %v1434, 2.5
        %vm1640 = vcmp.ge.f32.partialorder %v1463, 2.5
        %vm1641 = vcmp.ge.f32.partialorder %v1492, 2.5
        %vm1642 = vcmp.ge.f32.partialorder %v1521, 2.5
        %vm1643 = vcmp.ge.f32.partialorder %v1550, 2.5
        %vm1644 = vcmp.ge.f32.partialorder %v1579, 2.5
        %v1645 = vsel %vm1581, 1.0, 0.0
        %v1646 = vsel %vm1582, 1.0, 0.0
        %v1647 = vsel %vm1583, 1.0, 0.0
        %v1648 = vsel %vm1584, 1.0, 0.0
        %v1649 = vsel %vm1585, 1.0, 0.0
        %v1650 = vsel %vm1586, 1.0, 0.0
        %v1651 = vsel %vm1587, 1.0, 0.0
        %v1652 = vsel %vm1588, 1.0, 0.0
        %v1653 = vsel %vm1589, 1.0, 0.0
        %v1654 = vsel %vm1590, 1.0, 0.0
        %v1655 = vsel %vm1591, 1.0, 0.0
        %v1656 = vsel %vm1592, 1.0, 0.0
        %v1657 = vsel %vm1593, 1.0, 0.0
        %v1658 = vsel %vm1594, 1.0, 0.0
        %v1659 = vsel %vm1595, 1.0, 0.0
        %v1660 = vsel %vm1596, 1.0, 0.0
        %v1661 = vsel %vm1597, 1.0, 0.0
        %v1662 = vsel %vm1598, 1.0, 0.0
        %v1663 = vsel %vm1599, 1.0, 0.0
        %v1664 = vsel %vm1600, 1.0, 0.0
        %v1665 = vsel %vm1601, 1.0, 0.0
        %v1666 = vsel %vm1602, 1.0, 0.0
        %v1667 = vsel %vm1603, 1.0, 0.0
        %v1668 = vsel %vm1604, 1.0, 0.0
        %v1669 = vsel %vm1605, 1.0, 0.0
        %v1670 = vsel %vm1606, 1.0, 0.0
        %v1671 = vsel %vm1607, 1.0, 0.0
        %v1672 = vsel %vm1608, 1.0, 0.0
        %v1673 = vsel %vm1609, 1.0, 0.0
        %v1674 = vsel %vm1610, 1.0, 0.0
        %v1675 = vsel %vm1611, 1.0, 0.0
        %v1676 = vsel %vm1612, 1.0, 0.0
        %v1677 = vsel %vm1613, 1.0, 0.0
        %v1678 = vsel %vm1614, 1.0, 0.0
        %v1679 = vsel %vm1615, 1.0, 0.0
        %v1680 = vsel %vm1616, 1.0, 0.0
        %v1681 = vsel %vm1617, 1.0, 0.0
        %v1682 = vsel %vm1618, 1.0, 0.0
        %v1683 = vsel %vm1619, 1.0, 0.0
        %v1684 = vsel %vm1620, 1.0, 0.0
        %v1685 = vsel %vm1621, 1.0, 0.0
        %v1686 = vsel %vm1622, 1.0, 0.0
        %v1687 = vsel %vm1623, 1.0, 0.0
        %v1688 = vsel %vm1624, 1.0, 0.0
        %v1689 = vsel %vm1625, 1.0, 0.0
        %v1690 = vsel %vm1626, 1.0, 0.0
        %v1691 = vsel %vm1627, 1.0, 0.0
        %v1692 = vsel %vm1628, 1.0, 0.0
        %v1693 = vsel %vm1629, 1.0, 0.0
        %v1694 = vsel %vm1630, 1.0, 0.0
        %v1695 = vsel %vm1631, 1.0, 0.0
        %v1696 = vsel %vm1632, 1.0, 0.0
        %v1697 = vsel %vm1633, 1.0, 0.0
        %v1698 = vsel %vm1634, 1.0, 0.0
        %v1699 = vsel %vm1635, 1.0, 0.0
        %v1700 = vsel %vm1636, 1.0, 0.0
        %v1701 = vsel %vm1637, 1.0, 0.0
        %v1702 = vsel %vm1638, 1.0, 0.0
        %v1703 = vsel %vm1639, 1.0, 0.0
        %v1704 = vsel %vm1640, 1.0, 0.0
        %v1705 = vsel %vm1641, 1.0, 0.0
        %v1706 = vsel %vm1642, 1.0, 0.0
        %v1707 = vsel %vm1643, 1.0, 0.0
        %v1708 = vsel %vm1644, 1.0, 0.0
        %v1709 = vld [vmem:[%s4] sm:$0xff]
        %v1711 = vsel %vm1336, %v1709, 0
        %1713 = vmatpush.msra.mxu0 0.0
        %1714 = vmatpush.msra.mxu0 0.0
        %1715 = vmatpush.msra.mxu0 0.0
        %1716 = vmatpush.msra.mxu0 0.0
        %1717 = vmatpush.msra.mxu0 0.0
        %1718 = vmatpush.msra.mxu0 0.0
        %1719 = vmatpush.msra.mxu0 0.0
        %1720 = vmatpush.msra.mxu0 0.0
        %1721 = vmatpush.msra.mxu0 %v1701
        %1722 = vmatpush.msra.mxu0 %v1693
        %1723 = vmatpush.msra.mxu0 %v1685
        %1724 = vmatpush.msra.mxu0 %v1677
        %1725 = vmatpush.msra.mxu0 %v1669
        %1726 = vmatpush.msra.mxu0 %v1661
        %1727 = vmatpush.msra.mxu0 %v1653
        %1728 = vmatpush.msra.mxu0 %v1645
        %1729 = vmatmul.f32.gmra.mxu0 %v1711
        %v1730 = vpop.f32.mrf.mxu0
        %v1731 = vadd.f32 0.0, %v1730
        %1732 = vdwg.mxu0
        %1733 = vmatpush.msra.mxu0 0.0
        %1734 = vmatpush.msra.mxu0 0.0
        %1735 = vmatpush.msra.mxu0 0.0
        %1736 = vmatpush.msra.mxu0 0.0
        %1737 = vmatpush.msra.mxu0 0.0
        %1738 = vmatpush.msra.mxu0 0.0
        %1739 = vmatpush.msra.mxu0 0.0
        %1740 = vmatpush.msra.mxu0 0.0
        %1741 = vmatpush.msra.mxu0 %v1702
        %1742 = vmatpush.msra.mxu0 %v1694
        %1743 = vmatpush.msra.mxu0 %v1686
        %1744 = vmatpush.msra.mxu0 %v1678
        %1745 = vmatpush.msra.mxu0 %v1670
        %1746 = vmatpush.msra.mxu0 %v1662
        %1747 = vmatpush.msra.mxu0 %v1654
        %1748 = vmatpush.msra.mxu0 %v1646
        %1749 = vmatmul.f32.gmra.mxu0 %v1711
        %v1750 = vpop.f32.mrf.mxu0
        %v1751 = vadd.f32 0.0, %v1750
        %1752 = vdwg.mxu0
        %1753 = vmatpush.msra.mxu0 0.0
        %1754 = vmatpush.msra.mxu0 0.0
        %1755 = vmatpush.msra.mxu0 0.0
        %1756 = vmatpush.msra.mxu0 0.0
        %1757 = vmatpush.msra.mxu0 0.0
        %1758 = vmatpush.msra.mxu0 0.0
        %1759 = vmatpush.msra.mxu0 0.0
        %1760 = vmatpush.msra.mxu0 0.0
        %1761 = vmatpush.msra.mxu0 %v1703
        %1762 = vmatpush.msra.mxu0 %v1695
        %1763 = vmatpush.msra.mxu0 %v1687
        %1764 = vmatpush.msra.mxu0 %v1679
        %1765 = vmatpush.msra.mxu0 %v1671
        %1766 = vmatpush.msra.mxu0 %v1663
        %1767 = vmatpush.msra.mxu0 %v1655
        %1768 = vmatpush.msra.mxu0 %v1647
        %1769 = vmatmul.f32.gmra.mxu0 %v1711
        %v1770 = vpop.f32.mrf.mxu0
        %v1771 = vadd.f32 0.0, %v1770
        %1772 = vdwg.mxu0
        %1773 = vmatpush.msra.mxu0 0.0
        %1774 = vmatpush.msra.mxu0 0.0
        %1775 = vmatpush.msra.mxu0 0.0
        %1776 = vmatpush.msra.mxu0 0.0
        %1777 = vmatpush.msra.mxu0 0.0
        %1778 = vmatpush.msra.mxu0 0.0
        %1779 = vmatpush.msra.mxu0 0.0
        %1780 = vmatpush.msra.mxu0 0.0
        %1781 = vmatpush.msra.mxu0 %v1704
        %1782 = vmatpush.msra.mxu0 %v1696
        %1783 = vmatpush.msra.mxu0 %v1688
        %1784 = vmatpush.msra.mxu0 %v1680
        %1785 = vmatpush.msra.mxu0 %v1672
        %1786 = vmatpush.msra.mxu0 %v1664
        %1787 = vmatpush.msra.mxu0 %v1656
        %1788 = vmatpush.msra.mxu0 %v1648
        %1789 = vmatmul.f32.gmra.mxu0 %v1711
        %v1790 = vpop.f32.mrf.mxu0
        %v1791 = vadd.f32 0.0, %v1790
        %1792 = vdwg.mxu0
        %1793 = vmatpush.msra.mxu0 0.0
        %1794 = vmatpush.msra.mxu0 0.0
        %1795 = vmatpush.msra.mxu0 0.0
        %1796 = vmatpush.msra.mxu0 0.0
        %1797 = vmatpush.msra.mxu0 0.0
        %1798 = vmatpush.msra.mxu0 0.0
        %1799 = vmatpush.msra.mxu0 0.0
        %1800 = vmatpush.msra.mxu0 0.0
        %1801 = vmatpush.msra.mxu0 %v1705
        %1802 = vmatpush.msra.mxu0 %v1697
        %1803 = vmatpush.msra.mxu0 %v1689
        %1804 = vmatpush.msra.mxu0 %v1681
        %1805 = vmatpush.msra.mxu0 %v1673
        %1806 = vmatpush.msra.mxu0 %v1665
        %1807 = vmatpush.msra.mxu0 %v1657
        %1808 = vmatpush.msra.mxu0 %v1649
        %1809 = vmatmul.f32.gmra.mxu0 %v1711
        %v1810 = vpop.f32.mrf.mxu0
        %v1811 = vadd.f32 0.0, %v1810
        %1812 = vdwg.mxu0
        %1813 = vmatpush.msra.mxu0 0.0
        %1814 = vmatpush.msra.mxu0 0.0
        %1815 = vmatpush.msra.mxu0 0.0
        %1816 = vmatpush.msra.mxu0 0.0
        %1817 = vmatpush.msra.mxu0 0.0
        %1818 = vmatpush.msra.mxu0 0.0
        %1819 = vmatpush.msra.mxu0 0.0
        %1820 = vmatpush.msra.mxu0 0.0
        %1821 = vmatpush.msra.mxu0 %v1706
        %1822 = vmatpush.msra.mxu0 %v1698
        %1823 = vmatpush.msra.mxu0 %v1690
        %1824 = vmatpush.msra.mxu0 %v1682
        %1825 = vmatpush.msra.mxu0 %v1674
        %1826 = vmatpush.msra.mxu0 %v1666
        %1827 = vmatpush.msra.mxu0 %v1658
        %1828 = vmatpush.msra.mxu0 %v1650
        %1829 = vmatmul.f32.gmra.mxu0 %v1711
        %v1830 = vpop.f32.mrf.mxu0
        %v1831 = vadd.f32 0.0, %v1830
        %1832 = vdwg.mxu0
        %1833 = vmatpush.msra.mxu0 0.0
        %1834 = vmatpush.msra.mxu0 0.0
        %1835 = vmatpush.msra.mxu0 0.0
        %1836 = vmatpush.msra.mxu0 0.0
        %1837 = vmatpush.msra.mxu0 0.0
        %1838 = vmatpush.msra.mxu0 0.0
        %1839 = vmatpush.msra.mxu0 0.0
        %1840 = vmatpush.msra.mxu0 0.0
        %1841 = vmatpush.msra.mxu0 %v1707
        %1842 = vmatpush.msra.mxu0 %v1699
        %1843 = vmatpush.msra.mxu0 %v1691
        %1844 = vmatpush.msra.mxu0 %v1683
        %1845 = vmatpush.msra.mxu0 %v1675
        %1846 = vmatpush.msra.mxu0 %v1667
        %1847 = vmatpush.msra.mxu0 %v1659
        %1848 = vmatpush.msra.mxu0 %v1651
        %1849 = vmatmul.f32.gmra.mxu0 %v1711
        %v1850 = vpop.f32.mrf.mxu0
        %v1851 = vadd.f32 0.0, %v1850
        %1852 = vdwg.mxu0
        %1853 = vmatpush.msra.mxu0 0.0
        %1854 = vmatpush.msra.mxu0 0.0
        %1855 = vmatpush.msra.mxu0 0.0
        %1856 = vmatpush.msra.mxu0 0.0
        %1857 = vmatpush.msra.mxu0 0.0
        %1858 = vmatpush.msra.mxu0 0.0
        %1859 = vmatpush.msra.mxu0 0.0
        %1860 = vmatpush.msra.mxu0 0.0
        %1861 = vmatpush.msra.mxu0 %v1708
        %1862 = vmatpush.msra.mxu0 %v1700
        %1863 = vmatpush.msra.mxu0 %v1692
        %1864 = vmatpush.msra.mxu0 %v1684
        %1865 = vmatpush.msra.mxu0 %v1676
        %1866 = vmatpush.msra.mxu0 %v1668
        %1867 = vmatpush.msra.mxu0 %v1660
        %1868 = vmatpush.msra.mxu0 %v1652
        %1869 = vmatmul.f32.gmra.mxu0 %v1711
        %v1870 = vpop.f32.mrf.mxu0
        %v1871 = vadd.f32 0.0, %v1870
        %1872 = vdwg.mxu0
        %1873 = vst [vmem:[%s218] sm:$0xff] %v1731
        %1874 = vst [vmem:[%s218 + $0x8] sm:$0xff] %v1751
        %1875 = vst [vmem:[%s218 + $0x10] sm:$0xff] %v1771
        %1876 = vst [vmem:[%s218 + $0x18] sm:$0xff] %v1791
        %1877 = vst [vmem:[%s218 + $0x20] sm:$0xff] %v1811
        %1878 = vst [vmem:[%s218 + $0x28] sm:$0xff] %v1831
        %1879 = vst [vmem:[%s218 + $0x30] sm:$0xff] %v1851
        %1880 = vst [vmem:[%s218 + $0x38] sm:$0xff] %v1871
        %s1881 = sand.u32 %s137, 1
        %s1882 = scalar_lea.sflag [#allocation3], %s1881
        %s1883 = sand.u32 %s137, 1
        %s1884 = smul.addr %s1883, 64
        %s1885 = scalar_lea.vmem [#allocation2], %s1884
        // Predicated region
        $region41: #{tpu_custom_call.1} parent=39 // pred_check
          %p1886 = pneg %p147
        $region42: #{tpu_custom_call.1} parent=39 // pred_check_branch
          %1888 = sbr.rel (%p1886) target = $region44
        $region43: #{tpu_custom_call.1} parent=39 // pred_region
          %s1889 = smul.u32 8, %s19
          %1891 = vsyncadd %s1882, 0
          %s1892 = smul.addr %s1889, 8
          %s1893 = scalar_lea.hbm %s5, %s1892
          %s1895 = sshll.u32 %s1885, 4
          %s1896 = int_to_ptr.vmem [resolvable:$true] %s1895
          %s1897 = sshll.u32 %s1893, 4
          %s1898 = int_to_ptr.hbm [resolvable:$true] %s1897
          %1900 = dma.vmem_to_hbm [thread:$0]  %s1896, 1024, %s1898, %s1882
        $region44: #{tpu_custom_call.1} parent=39 // pred_fallthru
          _
      $region40: #{tpu_custom_call.1} parent=5 // pred_fallthru
        _
      %p1901 = scmp.le.s32.totalorder 2, %s14
      // Predicated region
      $region45: #{tpu_custom_call.1} parent=5 // pred_check
        %p1902 = pneg %p1901
      $region46: #{tpu_custom_call.1} parent=5 // pred_check_branch
        %1904 = sbr.rel (%p1902) target = $region48
      $region47: #{tpu_custom_call.1} parent=5 // pred_region
        %s1905 = ssub.s32 %s14, 2
        // Predicated region
        $region49: #{tpu_custom_call.1} parent=47 // pred_check
          %p1906 = pneg %p153
        $region50: #{tpu_custom_call.1} parent=47 // pred_check_branch
          %1908 = sbr.rel (%p1906) target = $region52
        $region51: #{tpu_custom_call.1} parent=47 // pred_region
          %s1909 = sand.u32 %s138, 1
          %s1910 = scalar_lea.sflag [#allocation3], %s1909
          %s1911 = sand.u32 %s138, 1
          %s1912 = smul.addr %s1911, 64
          %s1913 = scalar_lea.vmem [#allocation2], %s1912
          %1915 = dma.done %s1910, 1024
        $region52: #{tpu_custom_call.1} parent=47 // pred_fallthru
          _
      $region48: #{tpu_custom_call.1} parent=5 // pred_fallthru
        _
    $region6: #{tpu_custom_call.1} parent=1 // loop_footer
      %s18 = sadd.s32 1, %s14
    $region7: #{tpu_custom_call.1} parent=1 // loop_footer_branch
      %13 = sbr.rel target = $region3
    $region8: #{tpu_custom_call.1} parent=1 // loop_exit
      _
    %1916 = vsyncpa [#allocation3], 1
    %s1917 = scalar_lea.sflag [#allocation3], 1
    %1918 = vsyncpa %s1917, 1

</llo_original>
